<compile_context>
chip_gen: v6e
topology: v6e:2x2x1
jax: 0.10.0
libtpu: 0.0.40
codegen_flags: <defaults>
</compile_context>

<pallas_src>
import functools

import jax
import jax.numpy as jnp
from jax import lax
from jax.experimental import pallas as pl
from jax.experimental.pallas import tpu as pltpu


# ---------------------------------------------------------------------------
# helpers
# ---------------------------------------------------------------------------
def _round_up(x, m):
    return ((x + m - 1) // m) * m


def _choose_tiles(n):
    """(tm, tk) for the aggregation sweep.

    As large as possible (tiles of 512-1024 get close to the HBM roofline), but
    keep at least 2 row tiles so the 'parallel' axis feeds both v7x TensorCores.
    tk always divides tm so n_pad = round_up(n, tm) is a multiple of both.
    """
    n128 = _round_up(max(n, 1), 128)
    tm = 128
    for cand in (1024, 512, 256, 128):
        if n128 >= 2 * cand:
            tm = cand
            break
    tk = min(tm, 512)
    return tm, tk


def _build_block_tables(edge_index, n_rt, n_kt, tm, tk):
    """Block-CSR tables over the (tm, tk) tiling of the dense normalized adjacency.

    counts[i]          : number of nonzero A column-blocks for row tile i
    kidx[i * n_kt + k] : k-th nonzero column-block id (ascending); padded entries
                         repeat the last valid id so the DMA block index does not
                         change (Pallas skips the re-fetch) and compute is gated
                         off with pl.when(k < counts[i]).
    """
    row, col = edge_index[0], edge_index[1]
    mask = jnp.zeros((n_rt, n_kt), dtype=bool).at[row // tm, col // tk].set(True)
    counts = jnp.sum(mask, axis=1).astype(jnp.int32)
    order = jnp.argsort(jnp.where(mask, 0, 1), axis=1, stable=True).astype(jnp.int32)
    last = order[jnp.arange(n_rt), jnp.maximum(counts - 1, 0)]
    k_iota = jnp.arange(n_kt, dtype=jnp.int32)[None, :]
    kidx = jnp.where(k_iota < counts[:, None], order, last[:, None])
    return counts, kidx.reshape(-1).astype(jnp.int32)


# ---------------------------------------------------------------------------
# kernel 1: fused  XW2 = relu(A @ (X @ W1) + b1) @ W2     (dropout eval = id)
# ---------------------------------------------------------------------------
def _layer1_kernel(cnt_ref, kidx_ref, a_ref, x_ref, w1_ref, b1_ref, w2_ref,
                   o_ref, acc_ref):
    i = pl.program_id(0)
    k = pl.program_id(1)

    @pl.when(k == 0)
    def _():
        acc_ref[...] = jnp.zeros_like(acc_ref)

    # Skip zero A blocks entirely (block-sparse); padded steps also skip DMA
    # because their block index repeats the previous one.
    @pl.when(k < cnt_ref[i])
    def _():
        xw1 = jnp.dot(x_ref[...], w1_ref[...],
                      preferred_element_type=jnp.float32).astype(a_ref.dtype)
        acc_ref[...] += jnp.dot(a_ref[...], xw1,
                                preferred_element_type=jnp.float32)

    @pl.when(k == pl.num_programs(1) - 1)
    def _():
        h = jnp.maximum(acc_ref[...] + b1_ref[...], 0.0)   # bias + ReLU
        # Dropout(p=0.3) in eval mode -> identity.
        xw2 = jnp.dot(h.astype(w2_ref.dtype), w2_ref[...],
                      preferred_element_type=jnp.float32)
        o_ref[...] = xw2.astype(o_ref.dtype)


def _layer1(a_p, x_p, w1_p, b1_p, w2_p, counts, kidx, *, tm, tk, out_dtype):
    n_pad = a_p.shape[0]
    c = x_p.shape[1]
    h_pad = w1_p.shape[1]
    o_pad = w2_p.shape[1]
    n_rt, n_kt = n_pad // tm, n_pad // tk

    return pl.pallas_call(
        _layer1_kernel,
        out_shape=jax.ShapeDtypeStruct((n_pad, o_pad), out_dtype),
        grid_spec=pltpu.PrefetchScalarGridSpec(
            num_scalar_prefetch=2,
            grid=(n_rt, n_kt),
            in_specs=[
                # A tile (i, nonzero column block)
                pl.BlockSpec((tm, tk),
                             lambda i, k, cnt_s, kidx_s: (i, kidx_s[i * n_kt + k])),
                # X slab for the same column block (narrow: only C features)
                pl.BlockSpec((tk, c),
                             lambda i, k, cnt_s, kidx_s: (kidx_s[i * n_kt + k], 0)),
                # resident weights / bias
                pl.BlockSpec((c, h_pad), lambda i, k, cnt_s, kidx_s: (0, 0)),
                pl.BlockSpec((1, h_pad), lambda i, k, cnt_s, kidx_s: (0, 0)),
                pl.BlockSpec((h_pad, o_pad), lambda i, k, cnt_s, kidx_s: (0, 0)),
            ],
            out_specs=pl.BlockSpec((tm, o_pad),
                                   lambda i, k, cnt_s, kidx_s: (i, 0)),
            scratch_shapes=[pltpu.VMEM((tm, h_pad), jnp.float32)],
        ),
        compiler_params=pltpu.CompilerParams(
            dimension_semantics=("parallel", "arbitrary")),
    )(counts, kidx, a_p, x_p, w1_p, b1_p, w2_p)


# ---------------------------------------------------------------------------
# kernel 2: OUT = softmax(relu(A @ XW2 + b2))             (dropout eval = id)
# ---------------------------------------------------------------------------
def _layer2_kernel(cnt_ref, kidx_ref, a_ref, xw2_ref, b2_ref, o_ref,
                   *, n_kt, tk, valid_cols, xw2_resident):
    i = pl.program_id(0)
    k = pl.program_id(1)

    @pl.when(k == 0)
    def _():
        o_ref[...] = jnp.zeros_like(o_ref)      # accumulate directly in f32 output

    @pl.when(k < cnt_ref[i])
    def _():
        if xw2_resident:
            kb = kidx_ref[i * n_kt + k]
            off = pl.multiple_of(kb * tk, tk)
            xw2 = xw2_ref[pl.ds(off, tk), :]
        else:
            xw2 = xw2_ref[...]
        o_ref[...] += jnp.dot(a_ref[...], xw2, preferred_element_type=jnp.float32)

    @pl.when(k == pl.num_programs(1) - 1)
    def _():
        h = jnp.maximum(o_ref[...] + b2_ref[...], 0.0)   # bias + ReLU
        # Dropout(p=0.3) eval -> identity; masked softmax over the real classes.
        col_id = lax.broadcasted_iota(jnp.int32, h.shape, 1)
        h = jnp.where(col_id < valid_cols, h, -1e30)
        m = jnp.max(h, axis=-1, keepdims=True)
        e = jnp.exp(h - m)
        o_ref[...] = e / jnp.sum(e, axis=-1, keepdims=True)


def _layer2(a_p, xw2, b2_p, counts, kidx, *, tm, tk, valid_cols):
    n_pad = a_p.shape[0]
    o_pad = xw2.shape[1]
    n_rt, n_kt = n_pad // tm, n_pad // tk

    # Keep the whole XW2 operand resident in VMEM when small (removes the
    # per-row-tile re-stream); fall back to slab streaming for large graphs
    # (v7x only has 64 MiB of VMEM).
    xw2_resident = (2 * n_pad * o_pad * xw2.dtype.itemsize) <= (8 << 20)
    if xw2_resident:
        xw2_spec = pl.BlockSpec((n_pad, o_pad), lambda i, k, cnt_s, kidx_s: (0, 0))
    else:
        xw2_spec = pl.BlockSpec(
            (tk, o_pad),
            lambda i, k, cnt_s, kidx_s: (kidx_s[i * n_kt + k], 0))

    kernel = functools.partial(_layer2_kernel, n_kt=n_kt, tk=tk,
                               valid_cols=valid_cols, xw2_resident=xw2_resident)
    return pl.pallas_call(
        kernel,
        out_shape=jax.ShapeDtypeStruct((n_pad, o_pad), jnp.float32),
        grid_spec=pltpu.PrefetchScalarGridSpec(
            num_scalar_prefetch=2,
            grid=(n_rt, n_kt),
            in_specs=[
                pl.BlockSpec((tm, tk),
                             lambda i, k, cnt_s, kidx_s: (i, kidx_s[i * n_kt + k])),
                xw2_spec,
                pl.BlockSpec((1, o_pad), lambda i, k, cnt_s, kidx_s: (0, 0)),
            ],
            out_specs=pl.BlockSpec((tm, o_pad),
                                   lambda i, k, cnt_s, kidx_s: (i, 0)),
        ),
        compiler_params=pltpu.CompilerParams(
            dimension_semantics=("parallel", "arbitrary")),
    )(counts, kidx, a_p, xw2, b2_p)


# ---------------------------------------------------------------------------
# full forward
# ---------------------------------------------------------------------------
def gcn_forward(x, edge_index, params, *, compute_dtype=jnp.bfloat16):
    n, c = x.shape
    h_dim = params["w1"].shape[1]   # 64
    o_dim = params["w2"].shape[1]   # num_classes

    tm, tk = _choose_tiles(n)
    n_pad = _round_up(n, tm)
    h_pad = _round_up(h_dim, 128)
    o_pad = _round_up(o_dim, 128)
    n_rt, n_kt = n_pad // tm, n_pad // tk

    # Normalized adjacency (GCNConv semantics: deg counts `col`, no self loops),
    # built straight into the padded compute-dtype buffer.
    row, col = edge_index[0], edge_index[1]
    deg = jnp.zeros((n,), jnp.float32).at[col].add(1.0)
    deg_inv_sqrt = jnp.where(deg > 0, lax.rsqrt(jnp.maximum(deg, 1e-12)), 0.0)
    norm = (deg_inv_sqrt[row] * deg_inv_sqrt[col]).astype(compute_dtype)
    a_p = jnp.zeros((n_pad, n_pad), compute_dtype).at[row, col].add(norm)

    # Block-sparsity tables for the (tm, tk) tiling of A.
    counts, kidx = _build_block_tables(edge_index, n_rt, n_kt, tm, tk)

    # Padded / lane-dense operands; streamed tensors in bf16, biases in f32.
    x_p = jnp.zeros((n_pad, c), compute_dtype).at[:n, :].set(x.astype(compute_dtype))
    w1_p = jnp.zeros((c, h_pad), compute_dtype).at[:, :h_dim].set(
        params["w1"].astype(compute_dtype))
    b1_p = jnp.zeros((1, h_pad), jnp.float32).at[0, :h_dim].set(
        params["b1"].astype(jnp.float32))
    w2_p = jnp.zeros((h_pad, o_pad), compute_dtype).at[:h_dim, :o_dim].set(
        params["w2"].astype(compute_dtype))
    b2_p = jnp.zeros((1, o_pad), jnp.float32).at[0, :o_dim].set(
        params["b2"].astype(jnp.float32))

    # Layer 1 (fused): XW2 = relu(A @ (X @ W1) + b1) @ W2
    xw2 = _layer1(a_p, x_p, w1_p, b1_p, w2_p, counts, kidx,
                  tm=tm, tk=tk, out_dtype=compute_dtype)
    # Layer 2: softmax(relu(A @ XW2 + b2), axis=1)
    out = _layer2(a_p, xw2, b2_p, counts, kidx, tm=tm, tk=tk, valid_cols=o_dim)
    return out[:n, :o_dim]


def gcn_forward_ref(x, edge_index, params):
    """Pure-JAX f32 reference for correctness checking."""
    n = x.shape[0]
    row, col = edge_index[0], edge_index[1]
    deg = jnp.zeros((n,), jnp.float32).at[col].add(1.0)
    dis = jnp.where(deg > 0, deg ** -0.5, 0.0)
    norm = dis[row] * dis[col]
    a = jnp.zeros((n, n), jnp.float32).at[row, col].add(norm)
    h = jnp.maximum(a @ (x @ params["w1"]) + params["b1"], 0.0)
    h = jnp.maximum(a @ (h @ params["w2"]) + params["b2"], 0.0)
    return jax.nn.softmax(h, axis=1)


if __name__ == "__main__":
    num_nodes = 16
    num_node_features = 16
    hidden = 64            # GCNConv(num_node_features, 64)
    num_classes = 8
    num_edges = 48

    key = jax.random.PRNGKey(0)
    kx, ke_row, ke_col, kw1, kb1, kw2, kb2 = jax.random.split(key, 7)

    x = jax.random.normal(kx, (num_nodes, num_node_features), dtype=jnp.float32)
    row = jax.random.randint(ke_row, (num_edges,), 0, num_nodes, dtype=jnp.int32)
    col = jax.random.randint(ke_col, (num_edges,), 0, num_nodes, dtype=jnp.int32)
    edge_index = jnp.stack([row, col], axis=0)   # (2, E), like PyG

    # Deterministic parameter init (shapes from GCNConv.__init__).
    params = {
        "w1": jax.random.normal(kw1, (num_node_features, hidden), jnp.float32) * 0.1,
        "b1": jax.random.normal(kb1, (hidden,), jnp.float32) * 0.1,
        "w2": jax.random.normal(kw2, (hidden, num_classes), jnp.float32) * 0.1,
        "b2": jax.random.normal(kb2, (num_classes,), jnp.float32) * 0.1,
    }

    out = jax.jit(gcn_forward)(x, edge_index, params)
    out = jax.block_until_ready(out)

    ref = gcn_forward_ref(x, edge_index, params)
    assert out.shape == (num_nodes, num_classes)
    # bf16 streamed operands => loose tolerance vs the f32 reference
    assert jnp.allclose(out, ref, atol=2e-2, rtol=2e-2), "mismatch vs JAX reference"
    assert jnp.allclose(jnp.sum(out, axis=1), 1.0, atol=1e-2), "softmax rows must sum to 1"

    print("KERNEL_OK")
</pallas_src>

<mosaic_0001>
module attributes {stable_mosaic.version = 11 : i64} {
  func.func private @main(%arg0: i32) attributes {dimension_semantics = [#tpu.dimension_semantics<core_parallel>], iteration_bounds = array<i64: 2>, tpu.core_type = #tpu.core_type<sc_scalar_subcore>, window_params = []} {
    return
  }
}

module attributes {stable_mosaic.version = 11 : i64} {
  func.func private @main(%arg0: i32) attributes {dimension_semantics = [#tpu.dimension_semantics<core_parallel>], iteration_bounds = array<i64: 2>, tpu.core_type = #tpu.core_type<sc_scalar_subcore>, window_params = []} {
    return
  }
}

module attributes {stable_mosaic.version = 11 : i64} {
  func.func @_layer1_kernel(%arg0: i32, %arg1: i32, %arg2: memref<1xi32, #tpu.memory_space<smem>>, %arg3: memref<1xi32, #tpu.memory_space<smem>>, %arg4: memref<128x128xbf16, #tpu.memory_space<vmem>>, %arg5: memref<128x16xbf16, #tpu.memory_space<vmem>>, %arg6: memref<16x128xbf16, #tpu.memory_space<vmem>>, %arg7: memref<1x128xf32, #tpu.memory_space<vmem>>, %arg8: memref<128x128xbf16, #tpu.memory_space<vmem>>, %arg9: memref<128x128xbf16, #tpu.memory_space<vmem>>, %arg10: memref<128x128xf32, #tpu.memory_space<vmem>>) attributes {dimension_semantics = [#tpu.dimension_semantics<parallel>, #tpu.dimension_semantics<arbitrary>], iteration_bounds = array<i64: 1, 1>, scalar_prefetch = 2 : i64, scratch_operands = 1 : i64, tpu.core_type = #tpu.core_type<tc>, window_params = [{transform_indices = @transform_0, window_bounds = array<i64: 128, 128>}, {transform_indices = @transform_1, window_bounds = array<i64: 128, 16>}, {pipeline_mode = #tpu.pipeline_mode<synchronous>, transform_indices = @transform_2, window_bounds = array<i64: 16, 128>}, {pipeline_mode = #tpu.pipeline_mode<synchronous>, transform_indices = @transform_3, window_bounds = array<i64: 1, 128>}, {pipeline_mode = #tpu.pipeline_mode<synchronous>, transform_indices = @transform_4, window_bounds = array<i64: 128, 128>}, {transform_indices = @transform_5, window_bounds = array<i64: 128, 128>}]} {
    %c0_i32 = arith.constant 0 : i32
    %0 = arith.cmpi eq, %arg1, %c0_i32 : i32
    %1 = arith.extui %0 : i1 to i32
    %c0_i32_0 = arith.constant 0 : i32
    %2 = arith.cmpi ne, %1, %c0_i32_0 : i32
    scf.if %2 {
      %cst = arith.constant 0.000000e+00 : f32
      %11 = vector.broadcast %cst : f32 to vector<128x128xf32>
      %c0 = arith.constant 0 : index
      %c0_4 = arith.constant 0 : index
      %12 = vector.load %arg10[%c0, %c0_4] : memref<128x128xf32, #tpu.memory_space<vmem>>, vector<128x128xf32>
      tpu.vector_store %arg10[%c0, %c0_4], %11 {strides = array<i32>} : memref<128x128xf32, #tpu.memory_space<vmem>>, vector<128x128xf32>,
    } else {
    }
    %3 = arith.index_cast %arg0 : i32 to index
    %4 = memref.load %arg2[%3] : memref<1xi32, #tpu.memory_space<smem>>
    %5 = arith.cmpi slt, %arg1, %4 : i32
    %6 = arith.extui %5 : i1 to i32
    %c0_i32_1 = arith.constant 0 : i32
    %7 = arith.cmpi ne, %6, %c0_i32_1 : i32
    scf.if %7 {
      %c0 = arith.constant 0 : index
      %c0_4 = arith.constant 0 : index
      %11 = vector.load %arg5[%c0, %c0_4] : memref<128x16xbf16, #tpu.memory_space<vmem>>, vector<128x16xbf16>
      %c0_5 = arith.constant 0 : index
      %c0_6 = arith.constant 0 : index
      %12 = vector.load %arg6[%c0_5, %c0_6] : memref<16x128xbf16, #tpu.memory_space<vmem>>, vector<16x128xbf16>
      %cst = arith.constant dense<0.000000e+00> : vector<128x128xf32>
      %13 = tpu.matmul %11, %12, %cst {dimension_numbers = #tpu.dot_dimension_numbers<[1], [0], [0], [1], [0, 0, 1, 1], [], []>} : vector<128x16xbf16>, vector<16x128xbf16>, vector<128x128xf32> -> vector<128x128xf32>
      %14 = arith.truncf %13 : vector<128x128xf32> to vector<128x128xbf16>
      %c0_7 = arith.constant 0 : index
      %c0_8 = arith.constant 0 : index
      %15 = vector.load %arg10[%c0_7, %c0_8] : memref<128x128xf32, #tpu.memory_space<vmem>>, vector<128x128xf32>
      %c0_9 = arith.constant 0 : index
      %c0_10 = arith.constant 0 : index
      %16 = vector.load %arg4[%c0_9, %c0_10] : memref<128x128xbf16, #tpu.memory_space<vmem>>, vector<128x128xbf16>
      %cst_11 = arith.constant dense<0.000000e+00> : vector<128x128xf32>
      %17 = tpu.matmul %16, %14, %cst_11 {dimension_numbers = #tpu.dot_dimension_numbers<[1], [0], [0], [1], [0, 0, 1, 1], [], []>} : vector<128x128xbf16>, vector<128x128xbf16>, vector<128x128xf32> -> vector<128x128xf32>
      %18 = arith.addf %15, %17 : vector<128x128xf32>
      %c0_12 = arith.constant 0 : index
      %c0_13 = arith.constant 0 : index
      %19 = vector.load %arg10[%c0_12, %c0_13] : memref<128x128xf32, #tpu.memory_space<vmem>>, vector<128x128xf32>
      tpu.vector_store %arg10[%c0_12, %c0_13], %18 {strides = array<i32>} : memref<128x128xf32, #tpu.memory_space<vmem>>, vector<128x128xf32>,
    } else {
    }
    %c0_i32_2 = arith.constant 0 : i32
    %8 = arith.cmpi eq, %arg1, %c0_i32_2 : i32
    %9 = arith.extui %8 : i1 to i32
    %c0_i32_3 = arith.constant 0 : i32
    %10 = arith.cmpi ne, %9, %c0_i32_3 : i32
    scf.if %10 {
      %c0 = arith.constant 0 : index
      %c0_4 = arith.constant 0 : index
      %11 = vector.load %arg10[%c0, %c0_4] : memref<128x128xf32, #tpu.memory_space<vmem>>, vector<128x128xf32>
      %c0_5 = arith.constant 0 : index
      %c0_6 = arith.constant 0 : index
      %12 = vector.load %arg7[%c0_5, %c0_6] : memref<1x128xf32, #tpu.memory_space<vmem>>, vector<1x128xf32>
      %13 = vector.broadcast %12 : vector<1x128xf32> to vector<128x128xf32>
      %14 = arith.addf %11, %13 : vector<128x128xf32>
      %cst = arith.constant 0.000000e+00 : f32
      %15 = vector.broadcast %cst : f32 to vector<128x128xf32>
      %16 = arith.maximumf %14, %15 : vector<128x128xf32>
      %17 = arith.truncf %16 : vector<128x128xf32> to vector<128x128xbf16>
      %c0_7 = arith.constant 0 : index
      %c0_8 = arith.constant 0 : index
      %18 = vector.load %arg8[%c0_7, %c0_8] : memref<128x128xbf16, #tpu.memory_space<vmem>>, vector<128x128xbf16>
      %cst_9 = arith.constant dense<0.000000e+00> : vector<128x128xf32>
      %19 = tpu.matmul %17, %18, %cst_9 {dimension_numbers = #tpu.dot_dimension_numbers<[1], [0], [0], [1], [0, 0, 1, 1], [], []>} : vector<128x128xbf16>, vector<128x128xbf16>, vector<128x128xf32> -> vector<128x128xf32>
      %20 = arith.truncf %19 : vector<128x128xf32> to vector<128x128xbf16>
      %c0_10 = arith.constant 0 : index
      %c0_11 = arith.constant 0 : index
      %21 = vector.load %arg9[%c0_10, %c0_11] : memref<128x128xbf16, #tpu.memory_space<vmem>>, vector<128x128xbf16>
      tpu.vector_store %arg9[%c0_10, %c0_11], %20 {strides = array<i32>} : memref<128x128xbf16, #tpu.memory_space<vmem>>, vector<128x128xbf16>,
    } else {
    }
    return
  }
  func.func @transform_0(%arg0: i32, %arg1: i32, %arg2: memref<1xi32, #tpu.memory_space<smem>>, %arg3: memref<1xi32, #tpu.memory_space<smem>>) -> (i32, i32) {
    %c1_i32 = arith.constant 1 : i32
    %0 = arith.muli %arg0, %c1_i32 : i32
    %1 = arith.addi %0, %arg1 : i32
    %2 = arith.index_cast %1 : i32 to index
    %3 = memref.load %arg3[%2] : memref<1xi32, #tpu.memory_space<smem>>
    %c0_i32 = arith.constant 0 : i32
    return %arg0, %3 : i32, i32
  }
  func.func @transform_1(%arg0: i32, %arg1: i32, %arg2: memref<1xi32, #tpu.memory_space<smem>>, %arg3: memref<1xi32, #tpu.memory_space<smem>>) -> (i32, i32) {
    %c1_i32 = arith.constant 1 : i32
    %0 = arith.muli %arg0, %c1_i32 : i32
    %1 = arith.addi %0, %arg1 : i32
    %2 = arith.index_cast %1 : i32 to index
    %3 = memref.load %arg3[%2] : memref<1xi32, #tpu.memory_space<smem>>
    %c0_i32 = arith.constant 0 : i32
    %c0_i32_0 = arith.constant 0 : i32
    return %3, %c0_i32 : i32, i32
  }
  func.func @transform_2(%arg0: i32, %arg1: i32, %arg2: memref<1xi32, #tpu.memory_space<smem>>, %arg3: memref<1xi32, #tpu.memory_space<smem>>) -> (i32, i32) {
    %c0_i32 = arith.constant 0 : i32
    %c0_i32_0 = arith.constant 0 : i32
    %c0_i32_1 = arith.constant 0 : i32
    return %c0_i32, %c0_i32_0 : i32, i32
  }
  func.func @transform_3(%arg0: i32, %arg1: i32, %arg2: memref<1xi32, #tpu.memory_space<smem>>, %arg3: memref<1xi32, #tpu.memory_space<smem>>) -> (i32, i32) {
    %c0_i32 = arith.constant 0 : i32
    %c0_i32_0 = arith.constant 0 : i32
    %c0_i32_1 = arith.constant 0 : i32
    return %c0_i32, %c0_i32_0 : i32, i32
  }
  func.func @transform_4(%arg0: i32, %arg1: i32, %arg2: memref<1xi32, #tpu.memory_space<smem>>, %arg3: memref<1xi32, #tpu.memory_space<smem>>) -> (i32, i32) {
    %c0_i32 = arith.constant 0 : i32
    %c0_i32_0 = arith.constant 0 : i32
    %c0_i32_1 = arith.constant 0 : i32
    return %c0_i32, %c0_i32_0 : i32, i32
  }
  func.func @transform_5(%arg0: i32, %arg1: i32, %arg2: memref<1xi32, #tpu.memory_space<smem>>, %arg3: memref<1xi32, #tpu.memory_space<smem>>) -> (i32, i32) {
    %c0_i32 = arith.constant 0 : i32
    %c0_i32_0 = arith.constant 0 : i32
    return %arg0, %c0_i32 : i32, i32
  }
}

module attributes {stable_mosaic.version = 11 : i64} {
  func.func @_layer2_kernel(%arg0: i32, %arg1: i32, %arg2: memref<1xi32, #tpu.memory_space<smem>>, %arg3: memref<1xi32, #tpu.memory_space<smem>>, %arg4: memref<128x128xbf16, #tpu.memory_space<vmem>>, %arg5: memref<128x128xbf16, #tpu.memory_space<vmem>>, %arg6: memref<1x128xf32, #tpu.memory_space<vmem>>, %arg7: memref<128x128xf32, #tpu.memory_space<vmem>>) attributes {dimension_semantics = [#tpu.dimension_semantics<parallel>, #tpu.dimension_semantics<arbitrary>], iteration_bounds = array<i64: 1, 1>, scalar_prefetch = 2 : i64, scratch_operands = 0 : i64, tpu.core_type = #tpu.core_type<tc>, window_params = [{transform_indices = @transform_0, window_bounds = array<i64: 128, 128>}, {pipeline_mode = #tpu.pipeline_mode<synchronous>, transform_indices = @transform_1, window_bounds = array<i64: 128, 128>}, {pipeline_mode = #tpu.pipeline_mode<synchronous>, transform_indices = @transform_2, window_bounds = array<i64: 1, 128>}, {transform_indices = @transform_3, window_bounds = array<i64: 128, 128>}]} {
    %c0_i32 = arith.constant 0 : i32
    %0 = arith.cmpi eq, %arg1, %c0_i32 : i32
    %1 = arith.extui %0 : i1 to i32
    %c0_i32_0 = arith.constant 0 : i32
    %2 = arith.cmpi ne, %1, %c0_i32_0 : i32
    scf.if %2 {
      %cst = arith.constant 0.000000e+00 : f32
      %11 = vector.broadcast %cst : f32 to vector<128x128xf32>
      %c0 = arith.constant 0 : index
      %c0_4 = arith.constant 0 : index
      %12 = vector.load %arg7[%c0, %c0_4] : memref<128x128xf32, #tpu.memory_space<vmem>>, vector<128x128xf32>
      tpu.vector_store %arg7[%c0, %c0_4], %11 {strides = array<i32>} : memref<128x128xf32, #tpu.memory_space<vmem>>, vector<128x128xf32>,
    } else {
    }
    %3 = arith.index_cast %arg0 : i32 to index
    %4 = memref.load %arg2[%3] : memref<1xi32, #tpu.memory_space<smem>>
    %5 = arith.cmpi slt, %arg1, %4 : i32
    %6 = arith.extui %5 : i1 to i32
    %c0_i32_1 = arith.constant 0 : i32
    %7 = arith.cmpi ne, %6, %c0_i32_1 : i32
    scf.if %7 {
      %c1_i32 = arith.constant 1 : i32
      %11 = arith.muli %arg0, %c1_i32 : i32
      %12 = arith.addi %11, %arg1 : i32
      %13 = arith.index_cast %12 : i32 to index
      %14 = memref.load %arg3[%13] : memref<1xi32, #tpu.memory_space<smem>>
      %c128_i32 = arith.constant 128 : i32
      %15 = arith.muli %14, %c128_i32 : i32
      %16 = tpu.assume_multiple %15, 128 : i32
      %17 = arith.index_cast %16 : i32 to index
      %c0 = arith.constant 0 : index
      %18 = vector.load %arg5[%17, %c0] : memref<128x128xbf16, #tpu.memory_space<vmem>>, vector<128x128xbf16>
      %c0_4 = arith.constant 0 : index
      %c0_5 = arith.constant 0 : index
      %19 = vector.load %arg7[%c0_4, %c0_5] : memref<128x128xf32, #tpu.memory_space<vmem>>, vector<128x128xf32>
      %c0_6 = arith.constant 0 : index
      %c0_7 = arith.constant 0 : index
      %20 = vector.load %arg4[%c0_6, %c0_7] : memref<128x128xbf16, #tpu.memory_space<vmem>>, vector<128x128xbf16>
      %cst = arith.constant dense<0.000000e+00> : vector<128x128xf32>
      %21 = tpu.matmul %20, %18, %cst {dimension_numbers = #tpu.dot_dimension_numbers<[1], [0], [0], [1], [0, 0, 1, 1], [], []>} : vector<128x128xbf16>, vector<128x128xbf16>, vector<128x128xf32> -> vector<128x128xf32>
      %22 = arith.addf %19, %21 : vector<128x128xf32>
      %c0_8 = arith.constant 0 : index
      %c0_9 = arith.constant 0 : index
      %23 = vector.load %arg7[%c0_8, %c0_9] : memref<128x128xf32, #tpu.memory_space<vmem>>, vector<128x128xf32>
      tpu.vector_store %arg7[%c0_8, %c0_9], %22 {strides = array<i32>} : memref<128x128xf32, #tpu.memory_space<vmem>>, vector<128x128xf32>,
    } else {
    }
    %c0_i32_2 = arith.constant 0 : i32
    %8 = arith.cmpi eq, %arg1, %c0_i32_2 : i32
    %9 = arith.extui %8 : i1 to i32
    %c0_i32_3 = arith.constant 0 : i32
    %10 = arith.cmpi ne, %9, %c0_i32_3 : i32
    scf.if %10 {
      %c0 = arith.constant 0 : index
      %c0_4 = arith.constant 0 : index
      %11 = vector.load %arg7[%c0, %c0_4] : memref<128x128xf32, #tpu.memory_space<vmem>>, vector<128x128xf32>
      %c0_5 = arith.constant 0 : index
      %c0_6 = arith.constant 0 : index
      %12 = vector.load %arg6[%c0_5, %c0_6] : memref<1x128xf32, #tpu.memory_space<vmem>>, vector<1x128xf32>
      %13 = vector.broadcast %12 : vector<1x128xf32> to vector<128x128xf32>
      %14 = arith.addf %11, %13 : vector<128x128xf32>
      %cst = arith.constant 0.000000e+00 : f32
      %15 = vector.broadcast %cst : f32 to vector<128x128xf32>
      %16 = arith.maximumf %14, %15 : vector<128x128xf32>
      %17 = tpu.iota {dimensions = array<i32: 1>} : vector<128x128xi32>
      %c8_i32 = arith.constant 8 : i32
      %18 = vector.broadcast %c8_i32 : i32 to vector<128x128xi32>
      %19 = arith.cmpi slt, %17, %18 : vector<128x128xi32>
      %cst_7 = arith.constant -1.000000e+30 : f32
      %20 = vector.broadcast %cst_7 : f32 to vector<128x128xf32>
      %21 = arith.select %19, %16, %20 : vector<128x128xi1>, vector<128x128xf32>
      %cst_8 = arith.constant dense<0xFF800000> : vector<128xf32>
      %22 = vector.multi_reduction <maximumf>, %21, %cst_8 [1] : vector<128x128xf32> to vector<128xf32>
      %23 = vector.shape_cast %22 : vector<128xf32> to vector<128x1xf32>
      %24 = vector.broadcast %23 : vector<128x1xf32> to vector<128x128xf32>
      %25 = arith.subf %21, %24 : vector<128x128xf32>
      %26 = math.exp %25 : vector<128x128xf32>
      %cst_9 = arith.constant dense<0.000000e+00> : vector<128xf32>
      %27 = vector.multi_reduction <add>, %26, %cst_9 [1] : vector<128x128xf32> to vector<128xf32>
      %28 = vector.shape_cast %27 : vector<128xf32> to vector<128x1xf32>
      %29 = vector.broadcast %28 : vector<128x1xf32> to vector<128x128xf32>
      %30 = arith.divf %26, %29 : vector<128x128xf32>
      %c0_10 = arith.constant 0 : index
      %c0_11 = arith.constant 0 : index
      %31 = vector.load %arg7[%c0_10, %c0_11] : memref<128x128xf32, #tpu.memory_space<vmem>>, vector<128x128xf32>
      tpu.vector_store %arg7[%c0_10, %c0_11], %30 {strides = array<i32>} : memref<128x128xf32, #tpu.memory_space<vmem>>, vector<128x128xf32>,
    } else {
    }
    return
  }
  func.func @transform_0(%arg0: i32, %arg1: i32, %arg2: memref<1xi32, #tpu.memory_space<smem>>, %arg3: memref<1xi32, #tpu.memory_space<smem>>) -> (i32, i32) {
    %c1_i32 = arith.constant 1 : i32
    %0 = arith.muli %arg0, %c1_i32 : i32
    %1 = arith.addi %0, %arg1 : i32
    %2 = arith.index_cast %1 : i32 to index
    %3 = memref.load %arg3[%2] : memref<1xi32, #tpu.memory_space<smem>>
    %c0_i32 = arith.constant 0 : i32
    return %arg0, %3 : i32, i32
  }
  func.func @transform_1(%arg0: i32, %arg1: i32, %arg2: memref<1xi32, #tpu.memory_space<smem>>, %arg3: memref<1xi32, #tpu.memory_space<smem>>) -> (i32, i32) {
    %c0_i32 = arith.constant 0 : i32
    %c0_i32_0 = arith.constant 0 : i32
    %c0_i32_1 = arith.constant 0 : i32
    return %c0_i32, %c0_i32_0 : i32, i32
  }
  func.func @transform_2(%arg0: i32, %arg1: i32, %arg2: memref<1xi32, #tpu.memory_space<smem>>, %arg3: memref<1xi32, #tpu.memory_space<smem>>) -> (i32, i32) {
    %c0_i32 = arith.constant 0 : i32
    %c0_i32_0 = arith.constant 0 : i32
    %c0_i32_1 = arith.constant 0 : i32
    return %c0_i32, %c0_i32_0 : i32, i32
  }
  func.func @transform_3(%arg0: i32, %arg1: i32, %arg2: memref<1xi32, #tpu.memory_space<smem>>, %arg3: memref<1xi32, #tpu.memory_space<smem>>) -> (i32, i32) {
    %c0_i32 = arith.constant 0 : i32
    %c0_i32_0 = arith.constant 0 : i32
    return %arg0, %c0_i32 : i32, i32
  }
}

</mosaic_0001>

<llo_original>
// kernel: gcn_forward.3
$region0: #{gcn_forward.3}
  #allocation0 [shape = 'u32[]', space=smem, size = 0x4, offset = 0x4, fixed_abs, tag = 'smem constant byte address 0x4 - core index']
  #allocation1 [shape = 'u32[144,128]{1,0:T(1,128)}', space=vmem, size = 0x12000, scoped, tag = 'internal scratch']
  #allocation2 [shape = 's32[1]{0}', space=sflag, size = 0x4, scoped, tag = 'scoped memory for gcn_forward.3']
  #allocation3 [shape = 's32[1]{0:T(128)S(6)}', space=smem, size = 0x200, scoped, tag = 'prefetched SMEM operand 0']
  #allocation4 [shape = 's32[1]{0:T(128)S(6)}', space=smem, size = 0x200, scoped, tag = 'prefetched SMEM operand 1']
  %s0 = inlined_call_operand.<no memory space> [shape: s32[1], index: 0, kind: input, shape index: {}]
  %s1 = inlined_call_operand.<no memory space> [shape: s32[1], index: 1, kind: input, shape index: {}]
  %s2 = inlined_call_operand.vmem [shape: bf16[128,128], index: 2, kind: input, shape index: {}]
  %s3 = inlined_call_operand.vmem [shape: bf16[128,128], index: 3, kind: input, shape index: {}]
  %s4 = inlined_call_operand.vmem [shape: f32[1,128], index: 4, kind: input, shape index: {}]
  %s5 = inlined_call_operand.vmem [shape: f32[128,128], index: 5, kind: output, shape index: {}]
  %s6 = sld [smem:[#allocation0]]
  $region34: #{gcn_forward.3} parent=0
    _
  %s8 = ssub.s32 1, %s6
  %s9 = scalar_select 0, %s8, %s6
  %10 = sst [smem:[#allocation3]] %s0
  %11 = sst [smem:[#allocation4]] %s1
  // Predicated region
  $region2: #{gcn_forward.3} parent=0 // pred_check
    _
  $region3: #{gcn_forward.3} parent=0 // pred_check_branch
    %13 = sbr.rel (0) target = $region5
  $region4: #{gcn_forward.3} parent=0 // pred_region
    %s14 = sadd.s32 0, 0
    %s15 = sld [smem:[#allocation4 + %s14]]
    %p16 = scmp.lt.s32.totalorder %s15, 0
    %s17 = scalar_select %p16, %s15, 0
    %s18 = smul.addr %s17, 4
    %s19 = scalar_lea.vmem %s2, %s18
    %s20 = sadd.s32 0, 0
    %s21 = sld [smem:[#allocation4 + %s20]]
  $region5: #{gcn_forward.3} parent=0 // pred_fallthru
    _
  // Predicated region
  $region6: #{gcn_forward.3} parent=0 // pred_check
    _
  $region7: #{gcn_forward.3} parent=0 // pred_check_branch
    %23 = sbr.rel (0) target = $region9
  $region8: #{gcn_forward.3} parent=0 // pred_region
    _
  $region9: #{gcn_forward.3} parent=0 // pred_fallthru
    _
  // Predicated region
  $region10: #{gcn_forward.3} parent=0 // pred_check
    _
  $region11: #{gcn_forward.3} parent=0 // pred_check_branch
    %25 = sbr.rel (0) target = $region13
  $region12: #{gcn_forward.3} parent=0 // pred_region
    _
  $region13: #{gcn_forward.3} parent=0 // pred_fallthru
    _
  %s26 = sadd.s32 0, 0
  %s27 = sld [smem:[#allocation4 + %s26]]
  %p28 = scmp.lt.s32.totalorder %s27, 0
  %s29 = scalar_select %p28, %s27, 0
  %s30 = smul.addr %s29, 4
  %s31 = scalar_lea.vmem %s2, %s30
  %s32 = sadd.s32 0, 0
  %s33 = sld [smem:[#allocation4 + %s32]]
  %p34 = scmp.lt.s32.totalorder %s33, 0
  %s35 = scalar_select %p34, %s33, 0
  %s36 = smul.addr %s35, 4
  %s37 = scalar_lea.vmem %s2, %s36
  %s38 = sadd.s32 0, 0
  %s39 = sld [smem:[#allocation4 + %s38]]
  %p41 = scmp.eq.s32.totalorder 0, 0
  // Predicated region
  $region14: #{gcn_forward.3} parent=0 // pred_check
    %p42 = pneg %p41
  $region15: #{gcn_forward.3} parent=0 // pred_check_branch
    %44 = sbr.rel (%p42) target = $region17
  $region16: #{gcn_forward.3} parent=0 // pred_region
    %45 = vst [vmem:[%s5] sm:$0xff] 0.0
    %46 = vst [vmem:[%s5 + $0x8] sm:$0xff] 0.0
    %47 = vst [vmem:[%s5 + $0x10] sm:$0xff] 0.0
    %48 = vst [vmem:[%s5 + $0x18] sm:$0xff] 0.0
    %49 = vst [vmem:[%s5 + $0x20] sm:$0xff] 0.0
    %50 = vst [vmem:[%s5 + $0x28] sm:$0xff] 0.0
    %51 = vst [vmem:[%s5 + $0x30] sm:$0xff] 0.0
    %52 = vst [vmem:[%s5 + $0x38] sm:$0xff] 0.0
    %53 = vst [vmem:[%s5 + $0x40] sm:$0xff] 0.0
    %54 = vst [vmem:[%s5 + $0x48] sm:$0xff] 0.0
    %55 = vst [vmem:[%s5 + $0x50] sm:$0xff] 0.0
    %56 = vst [vmem:[%s5 + $0x58] sm:$0xff] 0.0
    %57 = vst [vmem:[%s5 + $0x60] sm:$0xff] 0.0
    %58 = vst [vmem:[%s5 + $0x68] sm:$0xff] 0.0
    %59 = vst [vmem:[%s5 + $0x70] sm:$0xff] 0.0
    %60 = vst [vmem:[%s5 + $0x78] sm:$0xff] 0.0
  $region17: #{gcn_forward.3} parent=0 // pred_fallthru
    _
  %s61 = sld [smem:[#allocation3]]
  %p62 = scmp.lt.s32.totalorder 0, %s61
  // Predicated region
  $region18: #{gcn_forward.3} parent=0 // pred_check
    %p63 = pneg %p62
  $region19: #{gcn_forward.3} parent=0 // pred_check_branch
    %65 = sbr.rel (%p63) target = $region21
  $region20: #{gcn_forward.3} parent=0 // pred_region
    %s66 = sadd.s32 0, 0
    %s67 = sld [smem:[#allocation4 + %s66]]
    %s68 = smul.u32 %s67, 128
    %s69 = sshra.s32 %s68, 3
    %s70 = sand.u32 %s68, 7
    %s71 = smul.addr %s69, 4
    %s72 = scalar_lea.vmem %s3, %s71
    %v73 = vld [vmem:[%s72] sm:$0xf]
    %v74 = vld [vmem:[%s72 + $0x4] sm:$0xf]
    %v75 = vld [vmem:[%s72 + $0x8] sm:$0xf]
    %v76 = vld [vmem:[%s72 + $0xc] sm:$0xf]
    %v77 = vld [vmem:[%s72 + $0x10] sm:$0xf]
    %v78 = vld [vmem:[%s72 + $0x14] sm:$0xf]
    %v79 = vld [vmem:[%s72 + $0x18] sm:$0xf]
    %v80 = vld [vmem:[%s72 + $0x1c] sm:$0xf]
    %v81 = vld [vmem:[%s72 + $0x20] sm:$0xf]
    %v82 = vld [vmem:[%s72 + $0x24] sm:$0xf]
    %v83 = vld [vmem:[%s72 + $0x28] sm:$0xf]
    %v84 = vld [vmem:[%s72 + $0x2c] sm:$0xf]
    %v85 = vld [vmem:[%s72 + $0x30] sm:$0xf]
    %v86 = vld [vmem:[%s72 + $0x34] sm:$0xf]
    %v87 = vld [vmem:[%s72 + $0x38] sm:$0xf]
    %v88 = vld [vmem:[%s72 + $0x3c] sm:$0xf]
    %v89 = vld [vmem:[%s5] sm:$0xff]
    %v90 = vld [vmem:[%s5 + $0x8] sm:$0xff]
    %v91 = vld [vmem:[%s5 + $0x10] sm:$0xff]
    %v92 = vld [vmem:[%s5 + $0x18] sm:$0xff]
    %v93 = vld [vmem:[%s5 + $0x20] sm:$0xff]
    %v94 = vld [vmem:[%s5 + $0x28] sm:$0xff]
    %v95 = vld [vmem:[%s5 + $0x30] sm:$0xff]
    %v96 = vld [vmem:[%s5 + $0x38] sm:$0xff]
    %v97 = vld [vmem:[%s5 + $0x40] sm:$0xff]
    %v98 = vld [vmem:[%s5 + $0x48] sm:$0xff]
    %v99 = vld [vmem:[%s5 + $0x50] sm:$0xff]
    %v100 = vld [vmem:[%s5 + $0x58] sm:$0xff]
    %v101 = vld [vmem:[%s5 + $0x60] sm:$0xff]
    %v102 = vld [vmem:[%s5 + $0x68] sm:$0xff]
    %v103 = vld [vmem:[%s5 + $0x70] sm:$0xff]
    %v104 = vld [vmem:[%s5 + $0x78] sm:$0xff]
    %v105 = vld [vmem:[%s37] sm:$0xf]
    %v106 = vld [vmem:[%s37 + $0x4] sm:$0xf]
    %v107 = vld [vmem:[%s37 + $0x8] sm:$0xf]
    %v108 = vld [vmem:[%s37 + $0xc] sm:$0xf]
    %v109 = vld [vmem:[%s37 + $0x10] sm:$0xf]
    %v110 = vld [vmem:[%s37 + $0x14] sm:$0xf]
    %v111 = vld [vmem:[%s37 + $0x18] sm:$0xf]
    %v112 = vld [vmem:[%s37 + $0x1c] sm:$0xf]
    %v113 = vld [vmem:[%s37 + $0x20] sm:$0xf]
    %v114 = vld [vmem:[%s37 + $0x24] sm:$0xf]
    %v115 = vld [vmem:[%s37 + $0x28] sm:$0xf]
    %v116 = vld [vmem:[%s37 + $0x2c] sm:$0xf]
    %v117 = vld [vmem:[%s37 + $0x30] sm:$0xf]
    %v118 = vld [vmem:[%s37 + $0x34] sm:$0xf]
    %v119 = vld [vmem:[%s37 + $0x38] sm:$0xf]
    %v120 = vld [vmem:[%s37 + $0x3c] sm:$0xf]
    %v137 = vunpack.c.l.b16 %v105
    %v138 = vunpack.c.l.b16 %v106
    %v139 = vunpack.c.l.b16 %v107
    %v140 = vunpack.c.l.b16 %v108
    %v141 = vunpack.c.l.b16 %v109
    %v142 = vunpack.c.l.b16 %v110
    %v143 = vunpack.c.l.b16 %v111
    %v144 = vunpack.c.l.b16 %v112
    %v145 = vunpack.c.l.b16 %v113
    %v146 = vunpack.c.l.b16 %v114
    %v147 = vunpack.c.l.b16 %v115
    %v148 = vunpack.c.l.b16 %v116
    %v149 = vunpack.c.l.b16 %v117
    %v150 = vunpack.c.l.b16 %v118
    %v151 = vunpack.c.l.b16 %v119
    %v152 = vunpack.c.l.b16 %v120
    %v153 = vpack.c.b16 %v138, %v137
    %v154 = vpack.c.b16 %v140, %v139
    %v155 = vpack.c.b16 %v142, %v141
    %v156 = vpack.c.b16 %v144, %v143
    %v157 = vpack.c.b16 %v146, %v145
    %v158 = vpack.c.b16 %v148, %v147
    %v159 = vpack.c.b16 %v150, %v149
    %v160 = vpack.c.b16 %v152, %v151
    %v185 = vunpack.c.l.b16 %v73
    %v186 = vunpack.c.l.b16 %v74
    %v187 = vunpack.c.l.b16 %v75
    %v188 = vunpack.c.l.b16 %v76
    %v189 = vunpack.c.l.b16 %v77
    %v190 = vunpack.c.l.b16 %v78
    %v191 = vunpack.c.l.b16 %v79
    %v192 = vunpack.c.l.b16 %v80
    %v193 = vunpack.c.l.b16 %v81
    %v194 = vunpack.c.l.b16 %v82
    %v195 = vunpack.c.l.b16 %v83
    %v196 = vunpack.c.l.b16 %v84
    %v197 = vunpack.c.l.b16 %v85
    %v198 = vunpack.c.l.b16 %v86
    %v199 = vunpack.c.l.b16 %v87
    %v200 = vunpack.c.l.b16 %v88
    %v201 = vpack.c.b16 %v186, %v185
    %v202 = vpack.c.b16 %v188, %v187
    %v203 = vpack.c.b16 %v190, %v189
    %v204 = vpack.c.b16 %v192, %v191
    %v205 = vpack.c.b16 %v194, %v193
    %v206 = vpack.c.b16 %v196, %v195
    %v207 = vpack.c.b16 %v198, %v197
    %v208 = vpack.c.b16 %v200, %v199
    %217 = vmatprep.subr.bf16.mxu0 0
    %218 = vmatpush1.bf16.msra.mxu0 %v208
    %219 = vmatprep.subr.bf16.mxu0 0
    %220 = vmatpush1.bf16.msra.mxu0 %v207
    %221 = vmatprep.subr.bf16.mxu0 0
    %222 = vmatpush1.bf16.msra.mxu0 %v206
    %223 = vmatprep.subr.bf16.mxu0 0
    %224 = vmatpush1.bf16.msra.mxu0 %v205
    %225 = vmatprep.subr.bf16.mxu0 0
    %226 = vmatpush1.bf16.msra.mxu0 %v204
    %227 = vmatprep.subr.bf16.mxu0 0
    %228 = vmatpush1.bf16.msra.mxu0 %v203
    %229 = vmatprep.subr.bf16.mxu0 0
    %230 = vmatpush1.bf16.msra.mxu0 %v202
    %231 = vmatprep.subr.bf16.mxu0 0
    %232 = vmatpush1.bf16.msra.mxu0 %v201
    %233 = vmatprep.subr.bf16.mxu0 0
    %234 = vmatpush2.bf16.msra.mxu0 0
    %235 = vmatprep.subr.bf16.mxu0 0
    %236 = vmatpush2.bf16.msra.mxu0 0
    %237 = vmatprep.subr.bf16.mxu0 0
    %238 = vmatpush2.bf16.msra.mxu0 0
    %239 = vmatprep.subr.bf16.mxu0 0
    %240 = vmatpush2.bf16.msra.mxu0 0
    %241 = vmatprep.subr.bf16.mxu0 0
    %242 = vmatpush2.bf16.msra.mxu0 0
    %243 = vmatprep.subr.bf16.mxu0 0
    %244 = vmatpush2.bf16.msra.mxu0 0
    %245 = vmatprep.subr.bf16.mxu0 0
    %246 = vmatpush2.bf16.msra.mxu0 0
    %247 = vmatprep.subr.bf16.mxu0 0
    %248 = vmatpush2.bf16.msra.mxu0 0
    %249 = vmatprep.mubr.bf16.mxu0 0
    %250 = vmatmul.mubr.bf16.gmra.mxu0 %v153
    %v251 = vpop.f32.mrf.mxu0
    %v252 = vadd.f32 0.0, %v251
    %v253 = vpop.f32.mrf.mxu0
    %v254 = vpop.f32.mrf.mxu0
    %v255 = vadd.f32 0.0, %v254
    %v256 = vpop.f32.mrf.mxu0
    %257 = vmatprep.mubr.bf16.mxu0 0
    %258 = vmatmul.mubr.bf16.gmra.mxu0 %v154
    %v259 = vpop.f32.mrf.mxu0
    %v260 = vadd.f32 0.0, %v259
    %v261 = vpop.f32.mrf.mxu0
    %v262 = vpop.f32.mrf.mxu0
    %v263 = vadd.f32 0.0, %v262
    %v264 = vpop.f32.mrf.mxu0
    %265 = vmatprep.mubr.bf16.mxu0 0
    %266 = vmatmul.mubr.bf16.gmra.mxu0 %v155
    %v267 = vpop.f32.mrf.mxu0
    %v268 = vadd.f32 0.0, %v267
    %v269 = vpop.f32.mrf.mxu0
    %v270 = vpop.f32.mrf.mxu0
    %v271 = vadd.f32 0.0, %v270
    %v272 = vpop.f32.mrf.mxu0
    %273 = vmatprep.mubr.bf16.mxu0 0
    %274 = vmatmul.mubr.bf16.gmra.mxu0 %v156
    %v275 = vpop.f32.mrf.mxu0
    %v276 = vadd.f32 0.0, %v275
    %v277 = vpop.f32.mrf.mxu0
    %v278 = vpop.f32.mrf.mxu0
    %v279 = vadd.f32 0.0, %v278
    %v280 = vpop.f32.mrf.mxu0
    %281 = vmatprep.mubr.bf16.mxu0 0
    %282 = vmatmul.mubr.bf16.gmra.mxu0 %v157
    %v283 = vpop.f32.mrf.mxu0
    %v284 = vadd.f32 0.0, %v283
    %v285 = vpop.f32.mrf.mxu0
    %v286 = vpop.f32.mrf.mxu0
    %v287 = vadd.f32 0.0, %v286
    %v288 = vpop.f32.mrf.mxu0
    %289 = vmatprep.mubr.bf16.mxu0 0
    %290 = vmatmul.mubr.bf16.gmra.mxu0 %v158
    %v291 = vpop.f32.mrf.mxu0
    %v292 = vadd.f32 0.0, %v291
    %v293 = vpop.f32.mrf.mxu0
    %v294 = vpop.f32.mrf.mxu0
    %v295 = vadd.f32 0.0, %v294
    %v296 = vpop.f32.mrf.mxu0
    %297 = vmatprep.mubr.bf16.mxu0 0
    %298 = vmatmul.mubr.bf16.gmra.mxu0 %v159
    %v299 = vpop.f32.mrf.mxu0
    %v300 = vadd.f32 0.0, %v299
    %v301 = vpop.f32.mrf.mxu0
    %v302 = vpop.f32.mrf.mxu0
    %v303 = vadd.f32 0.0, %v302
    %v304 = vpop.f32.mrf.mxu0
    %305 = vmatprep.mubr.bf16.mxu0 0
    %306 = vmatmul.mubr.bf16.gmra.mxu0 %v160
    %v307 = vpop.f32.mrf.mxu0
    %v308 = vadd.f32 0.0, %v307
    %v309 = vpop.f32.mrf.mxu0
    %v310 = vpop.f32.mrf.mxu0
    %v311 = vadd.f32 0.0, %v310
    %v312 = vpop.f32.mrf.mxu0
    %313 = vdwg.mxu0
    %v314 = vadd.f32 %v89, %v252
    %v315 = vadd.f32 %v90, %v255
    %v316 = vadd.f32 %v91, %v260
    %v317 = vadd.f32 %v92, %v263
    %v318 = vadd.f32 %v93, %v268
    %v319 = vadd.f32 %v94, %v271
    %v320 = vadd.f32 %v95, %v276
    %v321 = vadd.f32 %v96, %v279
    %v322 = vadd.f32 %v97, %v284
    %v323 = vadd.f32 %v98, %v287
    %v324 = vadd.f32 %v99, %v292
    %v325 = vadd.f32 %v100, %v295
    %v326 = vadd.f32 %v101, %v300
    %v327 = vadd.f32 %v102, %v303
    %v328 = vadd.f32 %v103, %v308
    %v329 = vadd.f32 %v104, %v311
    %330 = vst [vmem:[%s5] sm:$0xff] %v314
    %331 = vst [vmem:[%s5 + $0x8] sm:$0xff] %v315
    %332 = vst [vmem:[%s5 + $0x10] sm:$0xff] %v316
    %333 = vst [vmem:[%s5 + $0x18] sm:$0xff] %v317
    %334 = vst [vmem:[%s5 + $0x20] sm:$0xff] %v318
    %335 = vst [vmem:[%s5 + $0x28] sm:$0xff] %v319
    %336 = vst [vmem:[%s5 + $0x30] sm:$0xff] %v320
    %337 = vst [vmem:[%s5 + $0x38] sm:$0xff] %v321
    %338 = vst [vmem:[%s5 + $0x40] sm:$0xff] %v322
    %339 = vst [vmem:[%s5 + $0x48] sm:$0xff] %v323
    %340 = vst [vmem:[%s5 + $0x50] sm:$0xff] %v324
    %341 = vst [vmem:[%s5 + $0x58] sm:$0xff] %v325
    %342 = vst [vmem:[%s5 + $0x60] sm:$0xff] %v326
    %343 = vst [vmem:[%s5 + $0x68] sm:$0xff] %v327
    %344 = vst [vmem:[%s5 + $0x70] sm:$0xff] %v328
    %345 = vst [vmem:[%s5 + $0x78] sm:$0xff] %v329
  $region21: #{gcn_forward.3} parent=0 // pred_fallthru
    _
  // Predicated region
  $region22: #{gcn_forward.3} parent=0 // pred_check
    %p346 = pneg %p41
  $region23: #{gcn_forward.3} parent=0 // pred_check_branch
    %348 = sbr.rel (%p346) target = $region25
  $region24: #{gcn_forward.3} parent=0 // pred_region
    %v349 = vld [vmem:[%s5] sm:$0xff]
    %v350 = vld [vmem:[%s5 + $0x8] sm:$0xff]
    %v351 = vld [vmem:[%s5 + $0x10] sm:$0xff]
    %v352 = vld [vmem:[%s5 + $0x18] sm:$0xff]
    %v353 = vld [vmem:[%s5 + $0x20] sm:$0xff]
    %v354 = vld [vmem:[%s5 + $0x28] sm:$0xff]
    %v355 = vld [vmem:[%s5 + $0x30] sm:$0xff]
    %v356 = vld [vmem:[%s5 + $0x38] sm:$0xff]
    %v357 = vld [vmem:[%s5 + $0x40] sm:$0xff]
    %v358 = vld [vmem:[%s5 + $0x48] sm:$0xff]
    %v359 = vld [vmem:[%s5 + $0x50] sm:$0xff]
    %v360 = vld [vmem:[%s5 + $0x58] sm:$0xff]
    %v361 = vld [vmem:[%s5 + $0x60] sm:$0xff]
    %v362 = vld [vmem:[%s5 + $0x68] sm:$0xff]
    %v363 = vld [vmem:[%s5 + $0x70] sm:$0xff]
    %v364 = vld [vmem:[%s5 + $0x78] sm:$0xff]
    %v365 = vld [vmem:[%s4] sm:$0x1]
    %v367 = vlaneseq
    %v368 = vshrl.u32 %v367, 7
    %v369 = vsub.s32 0, %v368
    %v370 = vrot.slane %v365, %v369
    %v372 = vadd.f32 %v349, %v370
    %v373 = vadd.f32 %v350, %v370
    %v374 = vadd.f32 %v351, %v370
    %v375 = vadd.f32 %v352, %v370
    %v376 = vadd.f32 %v353, %v370
    %v377 = vadd.f32 %v354, %v370
    %v378 = vadd.f32 %v355, %v370
    %v379 = vadd.f32 %v356, %v370
    %v380 = vadd.f32 %v357, %v370
    %v381 = vadd.f32 %v358, %v370
    %v382 = vadd.f32 %v359, %v370
    %v383 = vadd.f32 %v360, %v370
    %v384 = vadd.f32 %v361, %v370
    %v385 = vadd.f32 %v362, %v370
    %v386 = vadd.f32 %v363, %v370
    %v387 = vadd.f32 %v364, %v370
    %v388 = vmax.f32 %v372, 0.0
    %v389 = vmax.f32 %v373, 0.0
    %v390 = vmax.f32 %v374, 0.0
    %v391 = vmax.f32 %v375, 0.0
    %v392 = vmax.f32 %v376, 0.0
    %v393 = vmax.f32 %v377, 0.0
    %v394 = vmax.f32 %v378, 0.0
    %v395 = vmax.f32 %v379, 0.0
    %v396 = vmax.f32 %v380, 0.0
    %v397 = vmax.f32 %v381, 0.0
    %v398 = vmax.f32 %v382, 0.0
    %v399 = vmax.f32 %v383, 0.0
    %v400 = vmax.f32 %v384, 0.0
    %v401 = vmax.f32 %v385, 0.0
    %v402 = vmax.f32 %v386, 0.0
    %v403 = vmax.f32 %v387, 0.0
    %v404 = vlaneseq
    %v405 = vand.u32 %v404, 127
    %vm406 = vcmp.lt.s32.totalorder %v405, 8
    %v407 = vsel %vm406, %v388, -1e+30
    %v408 = vsel %vm406, %v389, -1e+30
    %v409 = vsel %vm406, %v390, -1e+30
    %v410 = vsel %vm406, %v391, -1e+30
    %v411 = vsel %vm406, %v392, -1e+30
    %v412 = vsel %vm406, %v393, -1e+30
    %v413 = vsel %vm406, %v394, -1e+30
    %v414 = vsel %vm406, %v395, -1e+30
    %v415 = vsel %vm406, %v396, -1e+30
    %v416 = vsel %vm406, %v397, -1e+30
    %v417 = vsel %vm406, %v398, -1e+30
    %v418 = vsel %vm406, %v399, -1e+30
    %v419 = vsel %vm406, %v400, -1e+30
    %v420 = vsel %vm406, %v401, -1e+30
    %v421 = vsel %vm406, %v402, -1e+30
    %v422 = vsel %vm406, %v403, -1e+30
    %423 = vmax.xlane.f32.xlu0 %v407
    %v424 = vpop.xlane.xlu0 %423
    %425 = vmax.xlane.f32.xlu0 %v408
    %v426 = vpop.xlane.xlu0 %425
    %427 = vmax.xlane.f32.xlu0 %v409
    %v428 = vpop.xlane.xlu0 %427
    %429 = vmax.xlane.f32.xlu0 %v410
    %v430 = vpop.xlane.xlu0 %429
    %431 = vmax.xlane.f32.xlu0 %v411
    %v432 = vpop.xlane.xlu0 %431
    %433 = vmax.xlane.f32.xlu0 %v412
    %v434 = vpop.xlane.xlu0 %433
    %435 = vmax.xlane.f32.xlu0 %v413
    %v436 = vpop.xlane.xlu0 %435
    %437 = vmax.xlane.f32.xlu0 %v414
    %v438 = vpop.xlane.xlu0 %437
    %439 = vmax.xlane.f32.xlu0 %v415
    %v440 = vpop.xlane.xlu0 %439
    %441 = vmax.xlane.f32.xlu0 %v416
    %v442 = vpop.xlane.xlu0 %441
    %443 = vmax.xlane.f32.xlu0 %v417
    %v444 = vpop.xlane.xlu0 %443
    %445 = vmax.xlane.f32.xlu0 %v418
    %v446 = vpop.xlane.xlu0 %445
    %447 = vmax.xlane.f32.xlu0 %v419
    %v448 = vpop.xlane.xlu0 %447
    %449 = vmax.xlane.f32.xlu0 %v420
    %v450 = vpop.xlane.xlu0 %449
    %451 = vmax.xlane.f32.xlu0 %v421
    %v452 = vpop.xlane.xlu0 %451
    %453 = vmax.xlane.f32.xlu0 %v422
    %v454 = vpop.xlane.xlu0 %453
    %v455 = vsub.f32 %v407, %v424
    %v456 = vsub.f32 %v408, %v426
    %v457 = vsub.f32 %v409, %v428
    %v458 = vsub.f32 %v410, %v430
    %v459 = vsub.f32 %v411, %v432
    %v460 = vsub.f32 %v412, %v434
    %v461 = vsub.f32 %v413, %v436
    %v462 = vsub.f32 %v414, %v438
    %v463 = vsub.f32 %v415, %v440
    %v464 = vsub.f32 %v416, %v442
    %v465 = vsub.f32 %v417, %v444
    %v466 = vsub.f32 %v418, %v446
    %v467 = vsub.f32 %v419, %v448
    %v468 = vsub.f32 %v420, %v450
    %v469 = vsub.f32 %v421, %v452
    %v470 = vsub.f32 %v422, %v454
    %v471 = vmul.f32 %v455, 1.442695
    %v472 = vpow.pop %v471
    %v473 = vmul.f32 %v456, 1.442695
    %v474 = vpow.pop %v473
    %v475 = vmul.f32 %v457, 1.442695
    %v476 = vpow.pop %v475
    %v477 = vmul.f32 %v458, 1.442695
    %v478 = vpow.pop %v477
    %v479 = vmul.f32 %v459, 1.442695
    %v480 = vpow.pop %v479
    %v481 = vmul.f32 %v460, 1.442695
    %v482 = vpow.pop %v481
    %v483 = vmul.f32 %v461, 1.442695
    %v484 = vpow.pop %v483
    %v485 = vmul.f32 %v462, 1.442695
    %v486 = vpow.pop %v485
    %v487 = vmul.f32 %v463, 1.442695
    %v488 = vpow.pop %v487
    %v489 = vmul.f32 %v464, 1.442695
    %v490 = vpow.pop %v489
    %v491 = vmul.f32 %v465, 1.442695
    %v492 = vpow.pop %v491
    %v493 = vmul.f32 %v466, 1.442695
    %v494 = vpow.pop %v493
    %v495 = vmul.f32 %v467, 1.442695
    %v496 = vpow.pop %v495
    %v497 = vmul.f32 %v468, 1.442695
    %v498 = vpow.pop %v497
    %v499 = vmul.f32 %v469, 1.442695
    %v500 = vpow.pop %v499
    %v501 = vmul.f32 %v470, 1.442695
    %v502 = vpow.pop %v501
    %503 = vadd.xlane.f32.xlu0 %v472
    %v504 = vpop.xlane.xlu0 %503
    %505 = vadd.xlane.f32.xlu0 %v474
    %v506 = vpop.xlane.xlu0 %505
    %507 = vadd.xlane.f32.xlu0 %v476
    %v508 = vpop.xlane.xlu0 %507
    %509 = vadd.xlane.f32.xlu0 %v478
    %v510 = vpop.xlane.xlu0 %509
    %511 = vadd.xlane.f32.xlu0 %v480
    %v512 = vpop.xlane.xlu0 %511
    %513 = vadd.xlane.f32.xlu0 %v482
    %v514 = vpop.xlane.xlu0 %513
    %515 = vadd.xlane.f32.xlu0 %v484
    %v516 = vpop.xlane.xlu0 %515
    %517 = vadd.xlane.f32.xlu0 %v486
    %v518 = vpop.xlane.xlu0 %517
    %519 = vadd.xlane.f32.xlu0 %v488
    %v520 = vpop.xlane.xlu0 %519
    %521 = vadd.xlane.f32.xlu0 %v490
    %v522 = vpop.xlane.xlu0 %521
    %523 = vadd.xlane.f32.xlu0 %v492
    %v524 = vpop.xlane.xlu0 %523
    %525 = vadd.xlane.f32.xlu0 %v494
    %v526 = vpop.xlane.xlu0 %525
    %527 = vadd.xlane.f32.xlu0 %v496
    %v528 = vpop.xlane.xlu0 %527
    %529 = vadd.xlane.f32.xlu0 %v498
    %v530 = vpop.xlane.xlu0 %529
    %531 = vadd.xlane.f32.xlu0 %v500
    %v532 = vpop.xlane.xlu0 %531
    %533 = vadd.xlane.f32.xlu0 %v502
    %v534 = vpop.xlane.xlu0 %533
    %v535 = vrcp.pop %v504
    %v536 = vmul.f32 %v472, %v535
    %v537 = vrcp.pop %v506
    %v538 = vmul.f32 %v474, %v537
    %v539 = vrcp.pop %v508
    %v540 = vmul.f32 %v476, %v539
    %v541 = vrcp.pop %v510
    %v542 = vmul.f32 %v478, %v541
    %v543 = vrcp.pop %v512
    %v544 = vmul.f32 %v480, %v543
    %v545 = vrcp.pop %v514
    %v546 = vmul.f32 %v482, %v545
    %v547 = vrcp.pop %v516
    %v548 = vmul.f32 %v484, %v547
    %v549 = vrcp.pop %v518
    %v550 = vmul.f32 %v486, %v549
    %v551 = vrcp.pop %v520
    %v552 = vmul.f32 %v488, %v551
    %v553 = vrcp.pop %v522
    %v554 = vmul.f32 %v490, %v553
    %v555 = vrcp.pop %v524
    %v556 = vmul.f32 %v492, %v555
    %v557 = vrcp.pop %v526
    %v558 = vmul.f32 %v494, %v557
    %v559 = vrcp.pop %v528
    %v560 = vmul.f32 %v496, %v559
    %v561 = vrcp.pop %v530
    %v562 = vmul.f32 %v498, %v561
    %v563 = vrcp.pop %v532
    %v564 = vmul.f32 %v500, %v563
    %v565 = vrcp.pop %v534
    %v566 = vmul.f32 %v502, %v565
    %567 = vst [vmem:[%s5] sm:$0xff] %v536
    %568 = vst [vmem:[%s5 + $0x8] sm:$0xff] %v538
    %569 = vst [vmem:[%s5 + $0x10] sm:$0xff] %v540
    %570 = vst [vmem:[%s5 + $0x18] sm:$0xff] %v542
    %571 = vst [vmem:[%s5 + $0x20] sm:$0xff] %v544
    %572 = vst [vmem:[%s5 + $0x28] sm:$0xff] %v546
    %573 = vst [vmem:[%s5 + $0x30] sm:$0xff] %v548
    %574 = vst [vmem:[%s5 + $0x38] sm:$0xff] %v550
    %575 = vst [vmem:[%s5 + $0x40] sm:$0xff] %v552
    %576 = vst [vmem:[%s5 + $0x48] sm:$0xff] %v554
    %577 = vst [vmem:[%s5 + $0x50] sm:$0xff] %v556
    %578 = vst [vmem:[%s5 + $0x58] sm:$0xff] %v558
    %579 = vst [vmem:[%s5 + $0x60] sm:$0xff] %v560
    %580 = vst [vmem:[%s5 + $0x68] sm:$0xff] %v562
    %581 = vst [vmem:[%s5 + $0x70] sm:$0xff] %v564
    %582 = vst [vmem:[%s5 + $0x78] sm:$0xff] %v566
  $region25: #{gcn_forward.3} parent=0 // pred_fallthru
    _
  // Predicated region
  $region26: #{gcn_forward.3} parent=0 // pred_check
    _
  $region27: #{gcn_forward.3} parent=0 // pred_check_branch
    %584 = sbr.rel (0) target = $region29
  $region28: #{gcn_forward.3} parent=0 // pred_region
    _
  $region29: #{gcn_forward.3} parent=0 // pred_fallthru
    _
  // Predicated region
  $region30: #{gcn_forward.3} parent=0 // pred_check
    _
  $region31: #{gcn_forward.3} parent=0 // pred_check_branch
    %586 = sbr.rel (0) target = $region33
  $region32: #{gcn_forward.3} parent=0 // pred_region
    _
  $region33: #{gcn_forward.3} parent=0 // pred_fallthru
    _

// kernel: gcn_forward.2
$region0: #{gcn_forward.2}
  #allocation0 [shape = 'u32[]', space=smem, size = 0x4, offset = 0x4, fixed_abs, tag = 'smem constant byte address 0x4 - core index']
  #allocation1 [shape = 'u32[144,128]{1,0:T(1,128)}', space=vmem, size = 0x12000, scoped, tag = 'internal scratch']
  #allocation2 [shape = 'f32[128,128]{1,0:T(8,128)}', space=vmem, size = 0x10000, scoped, tag = 'scratch operand']
  #allocation3 [shape = 's32[1]{0}', space=sflag, size = 0x4, scoped, tag = 'scoped memory for gcn_forward.2']
  #allocation4 [shape = 's32[1]{0:T(128)S(6)}', space=smem, size = 0x200, scoped, tag = 'prefetched SMEM operand 0']
  #allocation5 [shape = 's32[1]{0:T(128)S(6)}', space=smem, size = 0x200, scoped, tag = 'prefetched SMEM operand 1']
  %s0 = inlined_call_operand.<no memory space> [shape: s32[1], index: 0, kind: input, shape index: {}]
  %s1 = inlined_call_operand.<no memory space> [shape: s32[1], index: 1, kind: input, shape index: {}]
  %s2 = inlined_call_operand.vmem [shape: bf16[128,128], index: 2, kind: input, shape index: {}]
  %s3 = inlined_call_operand.vmem [shape: bf16[128,16], index: 3, kind: input, shape index: {}]
  %s4 = inlined_call_operand.vmem [shape: bf16[16,128], index: 4, kind: input, shape index: {}]
  %s5 = inlined_call_operand.vmem [shape: f32[1,128], index: 5, kind: input, shape index: {}]
  %s6 = inlined_call_operand.vmem [shape: bf16[128,128], index: 6, kind: input, shape index: {}]
  %s7 = inlined_call_operand.vmem [shape: bf16[128,128], index: 7, kind: output, shape index: {}]
  %s8 = sld [smem:[#allocation0]]
  $region42: #{gcn_forward.2} parent=0
    _
  %s10 = ssub.s32 1, %s8
  %s11 = scalar_select 0, %s10, %s8
  %12 = sst [smem:[#allocation4]] %s0
  %13 = sst [smem:[#allocation5]] %s1
  // Predicated region
  $region2: #{gcn_forward.2} parent=0 // pred_check
    _
  $region3: #{gcn_forward.2} parent=0 // pred_check_branch
    %15 = sbr.rel (0) target = $region5
  $region4: #{gcn_forward.2} parent=0 // pred_region
    %s16 = sadd.s32 0, 0
    %s17 = sld [smem:[#allocation5 + %s16]]
    %p18 = scmp.lt.s32.totalorder %s17, 0
    %s19 = scalar_select %p18, %s17, 0
    %s20 = smul.addr %s19, 4
    %s21 = scalar_lea.vmem %s2, %s20
    %s22 = sadd.s32 0, 0
    %s23 = sld [smem:[#allocation5 + %s22]]
  $region5: #{gcn_forward.2} parent=0 // pred_fallthru
    _
  // Predicated region
  $region6: #{gcn_forward.2} parent=0 // pred_check
    _
  $region7: #{gcn_forward.2} parent=0 // pred_check_branch
    %25 = sbr.rel (0) target = $region9
  $region8: #{gcn_forward.2} parent=0 // pred_region
    %s26 = sadd.s32 0, 0
    %s27 = sld [smem:[#allocation5 + %s26]]
    %s28 = smul.u32 16, %s27
    %p29 = scmp.lt.s32.totalorder %s28, 15
    %s30 = scalar_select %p29, %s28, 15
    %s31 = smul.addr %s30, 4
    %s32 = scalar_lea.vmem %s3, %s31
    %s33 = sadd.s32 0, 0
    %s34 = sld [smem:[#allocation5 + %s33]]
    %s35 = smul.u32 16, %s34
  $region9: #{gcn_forward.2} parent=0 // pred_fallthru
    _
  // Predicated region
  $region10: #{gcn_forward.2} parent=0 // pred_check
    _
  $region11: #{gcn_forward.2} parent=0 // pred_check_branch
    %37 = sbr.rel (0) target = $region13
  $region12: #{gcn_forward.2} parent=0 // pred_region
    _
  $region13: #{gcn_forward.2} parent=0 // pred_fallthru
    _
  // Predicated region
  $region14: #{gcn_forward.2} parent=0 // pred_check
    _
  $region15: #{gcn_forward.2} parent=0 // pred_check_branch
    %39 = sbr.rel (0) target = $region17
  $region16: #{gcn_forward.2} parent=0 // pred_region
    _
  $region17: #{gcn_forward.2} parent=0 // pred_fallthru
    _
  // Predicated region
  $region18: #{gcn_forward.2} parent=0 // pred_check
    _
  $region19: #{gcn_forward.2} parent=0 // pred_check_branch
    %41 = sbr.rel (0) target = $region21
  $region20: #{gcn_forward.2} parent=0 // pred_region
    _
  $region21: #{gcn_forward.2} parent=0 // pred_fallthru
    _
  %s42 = sadd.s32 0, 0
  %s43 = sld [smem:[#allocation5 + %s42]]
  %p44 = scmp.lt.s32.totalorder %s43, 0
  %s45 = scalar_select %p44, %s43, 0
  %s46 = smul.addr %s45, 4
  %s47 = scalar_lea.vmem %s2, %s46
  %s48 = sadd.s32 0, 0
  %s49 = sld [smem:[#allocation5 + %s48]]
  %s50 = smul.u32 16, %s49
  %p51 = scmp.lt.s32.totalorder %s50, 15
  %s52 = scalar_select %p51, %s50, 15
  %s53 = smul.addr %s52, 4
  %s54 = scalar_lea.vmem %s3, %s53
  %s55 = sadd.s32 0, 0
  %s56 = sld [smem:[#allocation5 + %s55]]
  %p57 = scmp.lt.s32.totalorder %s56, 0
  %s58 = scalar_select %p57, %s56, 0
  %s59 = smul.addr %s58, 4
  %s60 = scalar_lea.vmem %s2, %s59
  %s61 = sadd.s32 0, 0
  %s62 = sld [smem:[#allocation5 + %s61]]
  %s63 = sadd.s32 0, 0
  %s64 = sld [smem:[#allocation5 + %s63]]
  %s65 = smul.u32 16, %s64
  %p66 = scmp.lt.s32.totalorder %s65, 15
  %s67 = scalar_select %p66, %s65, 15
  %s68 = smul.addr %s67, 4
  %s69 = scalar_lea.vmem %s3, %s68
  %s70 = sadd.s32 0, 0
  %s71 = sld [smem:[#allocation5 + %s70]]
  %s72 = smul.u32 16, %s71
  %p74 = scmp.eq.s32.totalorder 0, 0
  // Predicated region
  $region22: #{gcn_forward.2} parent=0 // pred_check
    %p75 = pneg %p74
  $region23: #{gcn_forward.2} parent=0 // pred_check_branch
    %77 = sbr.rel (%p75) target = $region25
  $region24: #{gcn_forward.2} parent=0 // pred_region
    %78 = vst [vmem:[#allocation2] sm:$0xff] 0.0
    %79 = vst [vmem:[#allocation2 + $0x8] sm:$0xff] 0.0
    %80 = vst [vmem:[#allocation2 + $0x10] sm:$0xff] 0.0
    %81 = vst [vmem:[#allocation2 + $0x18] sm:$0xff] 0.0
    %82 = vst [vmem:[#allocation2 + $0x20] sm:$0xff] 0.0
    %83 = vst [vmem:[#allocation2 + $0x28] sm:$0xff] 0.0
    %84 = vst [vmem:[#allocation2 + $0x30] sm:$0xff] 0.0
    %85 = vst [vmem:[#allocation2 + $0x38] sm:$0xff] 0.0
    %86 = vst [vmem:[#allocation2 + $0x40] sm:$0xff] 0.0
    %87 = vst [vmem:[#allocation2 + $0x48] sm:$0xff] 0.0
    %88 = vst [vmem:[#allocation2 + $0x50] sm:$0xff] 0.0
    %89 = vst [vmem:[#allocation2 + $0x58] sm:$0xff] 0.0
    %90 = vst [vmem:[#allocation2 + $0x60] sm:$0xff] 0.0
    %91 = vst [vmem:[#allocation2 + $0x68] sm:$0xff] 0.0
    %92 = vst [vmem:[#allocation2 + $0x70] sm:$0xff] 0.0
    %93 = vst [vmem:[#allocation2 + $0x78] sm:$0xff] 0.0
  $region25: #{gcn_forward.2} parent=0 // pred_fallthru
    _
  %s94 = sld [smem:[#allocation4]]
  %p95 = scmp.lt.s32.totalorder 0, %s94
  // Predicated region
  $region26: #{gcn_forward.2} parent=0 // pred_check
    %p96 = pneg %p95
  $region27: #{gcn_forward.2} parent=0 // pred_check_branch
    %98 = sbr.rel (%p96) target = $region29
  $region28: #{gcn_forward.2} parent=0 // pred_region
    %v99 = vld [vmem:[%s69] sm:$0xf]
    %v100 = vld [vmem:[%s69 + $0x4] sm:$0xf]
    %v101 = vld [vmem:[%s69 + $0x8] sm:$0xf]
    %v102 = vld [vmem:[%s69 + $0xc] sm:$0xf]
    %v103 = vld [vmem:[%s69 + $0x10] sm:$0xf]
    %v104 = vld [vmem:[%s69 + $0x14] sm:$0xf]
    %v105 = vld [vmem:[%s69 + $0x18] sm:$0xf]
    %v106 = vld [vmem:[%s69 + $0x1c] sm:$0xf]
    %v107 = vld [vmem:[%s69 + $0x20] sm:$0xf]
    %v108 = vld [vmem:[%s69 + $0x24] sm:$0xf]
    %v109 = vld [vmem:[%s69 + $0x28] sm:$0xf]
    %v110 = vld [vmem:[%s69 + $0x2c] sm:$0xf]
    %v111 = vld [vmem:[%s69 + $0x30] sm:$0xf]
    %v112 = vld [vmem:[%s69 + $0x34] sm:$0xf]
    %v113 = vld [vmem:[%s69 + $0x38] sm:$0xf]
    %v114 = vld [vmem:[%s69 + $0x3c] sm:$0xf]
    %v115 = vld [vmem:[%s4] sm:$0xf]
    %v116 = vld [vmem:[%s4 + $0x4] sm:$0xf]
    %v133 = vunpack.c.l.b16 %v99
    %v134 = vunpack.c.l.b16 %v100
    %v135 = vunpack.c.l.b16 %v101
    %v136 = vunpack.c.l.b16 %v102
    %v137 = vunpack.c.l.b16 %v103
    %v138 = vunpack.c.l.b16 %v104
    %v139 = vunpack.c.l.b16 %v105
    %v140 = vunpack.c.l.b16 %v106
    %v141 = vunpack.c.l.b16 %v107
    %v142 = vunpack.c.l.b16 %v108
    %v143 = vunpack.c.l.b16 %v109
    %v144 = vunpack.c.l.b16 %v110
    %v145 = vunpack.c.l.b16 %v111
    %v146 = vunpack.c.l.b16 %v112
    %v147 = vunpack.c.l.b16 %v113
    %v148 = vunpack.c.l.b16 %v114
    %v149 = vpack.c.b16 %v134, %v133
    %v150 = vpack.c.b16 %v136, %v135
    %v151 = vpack.c.b16 %v138, %v137
    %v152 = vpack.c.b16 %v140, %v139
    %v153 = vpack.c.b16 %v142, %v141
    %v154 = vpack.c.b16 %v144, %v143
    %v155 = vpack.c.b16 %v146, %v145
    %v156 = vpack.c.b16 %v148, %v147
    %v159 = vunpack.c.l.b16 %v115
    %v160 = vunpack.c.l.b16 %v116
    %v161 = vpack.c.b16 %v160, %v159
    %vm163 = vcmask 130048
    %v165 = vsel %vm163, %v149, 0
    %v168 = vsel %vm163, %v150, 0
    %v171 = vsel %vm163, %v151, 0
    %v174 = vsel %vm163, %v152, 0
    %v177 = vsel %vm163, %v153, 0
    %v180 = vsel %vm163, %v154, 0
    %v183 = vsel %vm163, %v155, 0
    %v186 = vsel %vm163, %v156, 0
    %188 = vmatprep.subr.bf16.mxu0 0
    %189 = vmatpush1.bf16.msra.mxu0 0
    %190 = vmatprep.subr.bf16.mxu0 0
    %191 = vmatpush1.bf16.msra.mxu0 0
    %192 = vmatprep.subr.bf16.mxu0 0
    %193 = vmatpush1.bf16.msra.mxu0 0
    %194 = vmatprep.subr.bf16.mxu0 0
    %195 = vmatpush1.bf16.msra.mxu0 0
    %196 = vmatprep.subr.bf16.mxu0 0
    %197 = vmatpush1.bf16.msra.mxu0 0
    %198 = vmatprep.subr.bf16.mxu0 0
    %199 = vmatpush1.bf16.msra.mxu0 0
    %200 = vmatprep.subr.bf16.mxu0 0
    %201 = vmatpush1.bf16.msra.mxu0 0
    %202 = vmatprep.subr.bf16.mxu0 0
    %203 = vmatpush1.bf16.msra.mxu0 %v161
    %204 = vmatprep.subr.bf16.mxu0 0
    %205 = vmatpush2.bf16.msra.mxu0 0
    %206 = vmatprep.subr.bf16.mxu0 0
    %207 = vmatpush2.bf16.msra.mxu0 0
    %208 = vmatprep.subr.bf16.mxu0 0
    %209 = vmatpush2.bf16.msra.mxu0 0
    %210 = vmatprep.subr.bf16.mxu0 0
    %211 = vmatpush2.bf16.msra.mxu0 0
    %212 = vmatprep.subr.bf16.mxu0 0
    %213 = vmatpush2.bf16.msra.mxu0 0
    %214 = vmatprep.subr.bf16.mxu0 0
    %215 = vmatpush2.bf16.msra.mxu0 0
    %216 = vmatprep.subr.bf16.mxu0 0
    %217 = vmatpush2.bf16.msra.mxu0 0
    %218 = vmatprep.subr.bf16.mxu0 0
    %219 = vmatpush2.bf16.msra.mxu0 0
    %220 = vmatprep.mubr.bf16.mxu0 0
    %221 = vmatmul.mubr.bf16.gmra.mxu0 %v165
    %v222 = vpop.f32.mrf.mxu0
    %v223 = vadd.f32 0.0, %v222
    %v224 = vpop.f32.mrf.mxu0
    %v225 = vpop.f32.mrf.mxu0
    %v226 = vadd.f32 0.0, %v225
    %v227 = vpop.f32.mrf.mxu0
    %228 = vmatprep.mubr.bf16.mxu0 0
    %229 = vmatmul.mubr.bf16.gmra.mxu0 %v168
    %v230 = vpop.f32.mrf.mxu0
    %v231 = vadd.f32 0.0, %v230
    %v232 = vpop.f32.mrf.mxu0
    %v233 = vpop.f32.mrf.mxu0
    %v234 = vadd.f32 0.0, %v233
    %v235 = vpop.f32.mrf.mxu0
    %236 = vmatprep.mubr.bf16.mxu0 0
    %237 = vmatmul.mubr.bf16.gmra.mxu0 %v171
    %v238 = vpop.f32.mrf.mxu0
    %v239 = vadd.f32 0.0, %v238
    %v240 = vpop.f32.mrf.mxu0
    %v241 = vpop.f32.mrf.mxu0
    %v242 = vadd.f32 0.0, %v241
    %v243 = vpop.f32.mrf.mxu0
    %244 = vmatprep.mubr.bf16.mxu0 0
    %245 = vmatmul.mubr.bf16.gmra.mxu0 %v174
    %v246 = vpop.f32.mrf.mxu0
    %v247 = vadd.f32 0.0, %v246
    %v248 = vpop.f32.mrf.mxu0
    %v249 = vpop.f32.mrf.mxu0
    %v250 = vadd.f32 0.0, %v249
    %v251 = vpop.f32.mrf.mxu0
    %252 = vmatprep.mubr.bf16.mxu0 0
    %253 = vmatmul.mubr.bf16.gmra.mxu0 %v177
    %v254 = vpop.f32.mrf.mxu0
    %v255 = vadd.f32 0.0, %v254
    %v256 = vpop.f32.mrf.mxu0
    %v257 = vpop.f32.mrf.mxu0
    %v258 = vadd.f32 0.0, %v257
    %v259 = vpop.f32.mrf.mxu0
    %260 = vmatprep.mubr.bf16.mxu0 0
    %261 = vmatmul.mubr.bf16.gmra.mxu0 %v180
    %v262 = vpop.f32.mrf.mxu0
    %v263 = vadd.f32 0.0, %v262
    %v264 = vpop.f32.mrf.mxu0
    %v265 = vpop.f32.mrf.mxu0
    %v266 = vadd.f32 0.0, %v265
    %v267 = vpop.f32.mrf.mxu0
    %268 = vmatprep.mubr.bf16.mxu0 0
    %269 = vmatmul.mubr.bf16.gmra.mxu0 %v183
    %v270 = vpop.f32.mrf.mxu0
    %v271 = vadd.f32 0.0, %v270
    %v272 = vpop.f32.mrf.mxu0
    %v273 = vpop.f32.mrf.mxu0
    %v274 = vadd.f32 0.0, %v273
    %v275 = vpop.f32.mrf.mxu0
    %276 = vmatprep.mubr.bf16.mxu0 0
    %277 = vmatmul.mubr.bf16.gmra.mxu0 %v186
    %v278 = vpop.f32.mrf.mxu0
    %v279 = vadd.f32 0.0, %v278
    %v280 = vpop.f32.mrf.mxu0
    %v281 = vpop.f32.mrf.mxu0
    %v282 = vadd.f32 0.0, %v281
    %v283 = vpop.f32.mrf.mxu0
    %284 = vdwg.mxu0
    %v285 = vpack.c.bf16 %v226, %v223
    %v286 = vpack.c.bf16 %v234, %v231
    %v287 = vpack.c.bf16 %v242, %v239
    %v288 = vpack.c.bf16 %v250, %v247
    %v289 = vpack.c.bf16 %v258, %v255
    %v290 = vpack.c.bf16 %v266, %v263
    %v291 = vpack.c.bf16 %v274, %v271
    %v292 = vpack.c.bf16 %v282, %v279
    %v293 = vld [vmem:[#allocation2] sm:$0xff]
    %v294 = vld [vmem:[#allocation2 + $0x8] sm:$0xff]
    %v295 = vld [vmem:[#allocation2 + $0x10] sm:$0xff]
    %v296 = vld [vmem:[#allocation2 + $0x18] sm:$0xff]
    %v297 = vld [vmem:[#allocation2 + $0x20] sm:$0xff]
    %v298 = vld [vmem:[#allocation2 + $0x28] sm:$0xff]
    %v299 = vld [vmem:[#allocation2 + $0x30] sm:$0xff]
    %v300 = vld [vmem:[#allocation2 + $0x38] sm:$0xff]
    %v301 = vld [vmem:[#allocation2 + $0x40] sm:$0xff]
    %v302 = vld [vmem:[#allocation2 + $0x48] sm:$0xff]
    %v303 = vld [vmem:[#allocation2 + $0x50] sm:$0xff]
    %v304 = vld [vmem:[#allocation2 + $0x58] sm:$0xff]
    %v305 = vld [vmem:[#allocation2 + $0x60] sm:$0xff]
    %v306 = vld [vmem:[#allocation2 + $0x68] sm:$0xff]
    %v307 = vld [vmem:[#allocation2 + $0x70] sm:$0xff]
    %v308 = vld [vmem:[#allocation2 + $0x78] sm:$0xff]
    %v309 = vld [vmem:[%s60] sm:$0xf]
    %v310 = vld [vmem:[%s60 + $0x4] sm:$0xf]
    %v311 = vld [vmem:[%s60 + $0x8] sm:$0xf]
    %v312 = vld [vmem:[%s60 + $0xc] sm:$0xf]
    %v313 = vld [vmem:[%s60 + $0x10] sm:$0xf]
    %v314 = vld [vmem:[%s60 + $0x14] sm:$0xf]
    %v315 = vld [vmem:[%s60 + $0x18] sm:$0xf]
    %v316 = vld [vmem:[%s60 + $0x1c] sm:$0xf]
    %v317 = vld [vmem:[%s60 + $0x20] sm:$0xf]
    %v318 = vld [vmem:[%s60 + $0x24] sm:$0xf]
    %v319 = vld [vmem:[%s60 + $0x28] sm:$0xf]
    %v320 = vld [vmem:[%s60 + $0x2c] sm:$0xf]
    %v321 = vld [vmem:[%s60 + $0x30] sm:$0xf]
    %v322 = vld [vmem:[%s60 + $0x34] sm:$0xf]
    %v323 = vld [vmem:[%s60 + $0x38] sm:$0xf]
    %v324 = vld [vmem:[%s60 + $0x3c] sm:$0xf]
    %v341 = vunpack.c.l.b16 %v309
    %v342 = vunpack.c.l.b16 %v310
    %v343 = vunpack.c.l.b16 %v311
    %v344 = vunpack.c.l.b16 %v312
    %v345 = vunpack.c.l.b16 %v313
    %v346 = vunpack.c.l.b16 %v314
    %v347 = vunpack.c.l.b16 %v315
    %v348 = vunpack.c.l.b16 %v316
    %v349 = vunpack.c.l.b16 %v317
    %v350 = vunpack.c.l.b16 %v318
    %v351 = vunpack.c.l.b16 %v319
    %v352 = vunpack.c.l.b16 %v320
    %v353 = vunpack.c.l.b16 %v321
    %v354 = vunpack.c.l.b16 %v322
    %v355 = vunpack.c.l.b16 %v323
    %v356 = vunpack.c.l.b16 %v324
    %v357 = vpack.c.b16 %v342, %v341
    %v358 = vpack.c.b16 %v344, %v343
    %v359 = vpack.c.b16 %v346, %v345
    %v360 = vpack.c.b16 %v348, %v347
    %v361 = vpack.c.b16 %v350, %v349
    %v362 = vpack.c.b16 %v352, %v351
    %v363 = vpack.c.b16 %v354, %v353
    %v364 = vpack.c.b16 %v356, %v355
    %373 = vmatprep.subr.bf16.mxu0 0
    %374 = vmatpush1.bf16.msra.mxu0 %v292
    %375 = vmatprep.subr.bf16.mxu0 0
    %376 = vmatpush1.bf16.msra.mxu0 %v291
    %377 = vmatprep.subr.bf16.mxu0 0
    %378 = vmatpush1.bf16.msra.mxu0 %v290
    %379 = vmatprep.subr.bf16.mxu0 0
    %380 = vmatpush1.bf16.msra.mxu0 %v289
    %381 = vmatprep.subr.bf16.mxu0 0
    %382 = vmatpush1.bf16.msra.mxu0 %v288
    %383 = vmatprep.subr.bf16.mxu0 0
    %384 = vmatpush1.bf16.msra.mxu0 %v287
    %385 = vmatprep.subr.bf16.mxu0 0
    %386 = vmatpush1.bf16.msra.mxu0 %v286
    %387 = vmatprep.subr.bf16.mxu0 0
    %388 = vmatpush1.bf16.msra.mxu0 %v285
    %389 = vmatprep.subr.bf16.mxu0 0
    %390 = vmatpush2.bf16.msra.mxu0 0
    %391 = vmatprep.subr.bf16.mxu0 0
    %392 = vmatpush2.bf16.msra.mxu0 0
    %393 = vmatprep.subr.bf16.mxu0 0
    %394 = vmatpush2.bf16.msra.mxu0 0
    %395 = vmatprep.subr.bf16.mxu0 0
    %396 = vmatpush2.bf16.msra.mxu0 0
    %397 = vmatprep.subr.bf16.mxu0 0
    %398 = vmatpush2.bf16.msra.mxu0 0
    %399 = vmatprep.subr.bf16.mxu0 0
    %400 = vmatpush2.bf16.msra.mxu0 0
    %401 = vmatprep.subr.bf16.mxu0 0
    %402 = vmatpush2.bf16.msra.mxu0 0
    %403 = vmatprep.subr.bf16.mxu0 0
    %404 = vmatpush2.bf16.msra.mxu0 0
    %405 = vmatprep.mubr.bf16.mxu0 0
    %406 = vmatmul.mubr.bf16.gmra.mxu0 %v357
    %v407 = vpop.f32.mrf.mxu0
    %v408 = vadd.f32 0.0, %v407
    %v409 = vpop.f32.mrf.mxu0
    %v410 = vpop.f32.mrf.mxu0
    %v411 = vadd.f32 0.0, %v410
    %v412 = vpop.f32.mrf.mxu0
    %413 = vmatprep.mubr.bf16.mxu0 0
    %414 = vmatmul.mubr.bf16.gmra.mxu0 %v358
    %v415 = vpop.f32.mrf.mxu0
    %v416 = vadd.f32 0.0, %v415
    %v417 = vpop.f32.mrf.mxu0
    %v418 = vpop.f32.mrf.mxu0
    %v419 = vadd.f32 0.0, %v418
    %v420 = vpop.f32.mrf.mxu0
    %421 = vmatprep.mubr.bf16.mxu0 0
    %422 = vmatmul.mubr.bf16.gmra.mxu0 %v359
    %v423 = vpop.f32.mrf.mxu0
    %v424 = vadd.f32 0.0, %v423
    %v425 = vpop.f32.mrf.mxu0
    %v426 = vpop.f32.mrf.mxu0
    %v427 = vadd.f32 0.0, %v426
    %v428 = vpop.f32.mrf.mxu0
    %429 = vmatprep.mubr.bf16.mxu0 0
    %430 = vmatmul.mubr.bf16.gmra.mxu0 %v360
    %v431 = vpop.f32.mrf.mxu0
    %v432 = vadd.f32 0.0, %v431
    %v433 = vpop.f32.mrf.mxu0
    %v434 = vpop.f32.mrf.mxu0
    %v435 = vadd.f32 0.0, %v434
    %v436 = vpop.f32.mrf.mxu0
    %437 = vmatprep.mubr.bf16.mxu0 0
    %438 = vmatmul.mubr.bf16.gmra.mxu0 %v361
    %v439 = vpop.f32.mrf.mxu0
    %v440 = vadd.f32 0.0, %v439
    %v441 = vpop.f32.mrf.mxu0
    %v442 = vpop.f32.mrf.mxu0
    %v443 = vadd.f32 0.0, %v442
    %v444 = vpop.f32.mrf.mxu0
    %445 = vmatprep.mubr.bf16.mxu0 0
    %446 = vmatmul.mubr.bf16.gmra.mxu0 %v362
    %v447 = vpop.f32.mrf.mxu0
    %v448 = vadd.f32 0.0, %v447
    %v449 = vpop.f32.mrf.mxu0
    %v450 = vpop.f32.mrf.mxu0
    %v451 = vadd.f32 0.0, %v450
    %v452 = vpop.f32.mrf.mxu0
    %453 = vmatprep.mubr.bf16.mxu0 0
    %454 = vmatmul.mubr.bf16.gmra.mxu0 %v363
    %v455 = vpop.f32.mrf.mxu0
    %v456 = vadd.f32 0.0, %v455
    %v457 = vpop.f32.mrf.mxu0
    %v458 = vpop.f32.mrf.mxu0
    %v459 = vadd.f32 0.0, %v458
    %v460 = vpop.f32.mrf.mxu0
    %461 = vmatprep.mubr.bf16.mxu0 0
    %462 = vmatmul.mubr.bf16.gmra.mxu0 %v364
    %v463 = vpop.f32.mrf.mxu0
    %v464 = vadd.f32 0.0, %v463
    %v465 = vpop.f32.mrf.mxu0
    %v466 = vpop.f32.mrf.mxu0
    %v467 = vadd.f32 0.0, %v466
    %v468 = vpop.f32.mrf.mxu0
    %469 = vdwg.mxu0
    %v470 = vadd.f32 %v293, %v408
    %v471 = vadd.f32 %v294, %v411
    %v472 = vadd.f32 %v295, %v416
    %v473 = vadd.f32 %v296, %v419
    %v474 = vadd.f32 %v297, %v424
    %v475 = vadd.f32 %v298, %v427
    %v476 = vadd.f32 %v299, %v432
    %v477 = vadd.f32 %v300, %v435
    %v478 = vadd.f32 %v301, %v440
    %v479 = vadd.f32 %v302, %v443
    %v480 = vadd.f32 %v303, %v448
    %v481 = vadd.f32 %v304, %v451
    %v482 = vadd.f32 %v305, %v456
    %v483 = vadd.f32 %v306, %v459
    %v484 = vadd.f32 %v307, %v464
    %v485 = vadd.f32 %v308, %v467
    %486 = vst [vmem:[#allocation2] sm:$0xff] %v470
    %487 = vst [vmem:[#allocation2 + $0x8] sm:$0xff] %v471
    %488 = vst [vmem:[#allocation2 + $0x10] sm:$0xff] %v472
    %489 = vst [vmem:[#allocation2 + $0x18] sm:$0xff] %v473
    %490 = vst [vmem:[#allocation2 + $0x20] sm:$0xff] %v474
    %491 = vst [vmem:[#allocation2 + $0x28] sm:$0xff] %v475
    %492 = vst [vmem:[#allocation2 + $0x30] sm:$0xff] %v476
    %493 = vst [vmem:[#allocation2 + $0x38] sm:$0xff] %v477
    %494 = vst [vmem:[#allocation2 + $0x40] sm:$0xff] %v478
    %495 = vst [vmem:[#allocation2 + $0x48] sm:$0xff] %v479
    %496 = vst [vmem:[#allocation2 + $0x50] sm:$0xff] %v480
    %497 = vst [vmem:[#allocation2 + $0x58] sm:$0xff] %v481
    %498 = vst [vmem:[#allocation2 + $0x60] sm:$0xff] %v482
    %499 = vst [vmem:[#allocation2 + $0x68] sm:$0xff] %v483
    %500 = vst [vmem:[#allocation2 + $0x70] sm:$0xff] %v484
    %501 = vst [vmem:[#allocation2 + $0x78] sm:$0xff] %v485
  $region29: #{gcn_forward.2} parent=0 // pred_fallthru
    _
  // Predicated region
  $region30: #{gcn_forward.2} parent=0 // pred_check
    %p502 = pneg %p74
  $region31: #{gcn_forward.2} parent=0 // pred_check_branch
    %504 = sbr.rel (%p502) target = $region33
  $region32: #{gcn_forward.2} parent=0 // pred_region
    %v505 = vld [vmem:[#allocation2] sm:$0xff]
    %v506 = vld [vmem:[#allocation2 + $0x8] sm:$0xff]
    %v507 = vld [vmem:[#allocation2 + $0x10] sm:$0xff]
    %v508 = vld [vmem:[#allocation2 + $0x18] sm:$0xff]
    %v509 = vld [vmem:[#allocation2 + $0x20] sm:$0xff]
    %v510 = vld [vmem:[#allocation2 + $0x28] sm:$0xff]
    %v511 = vld [vmem:[#allocation2 + $0x30] sm:$0xff]
    %v512 = vld [vmem:[#allocation2 + $0x38] sm:$0xff]
    %v513 = vld [vmem:[#allocation2 + $0x40] sm:$0xff]
    %v514 = vld [vmem:[#allocation2 + $0x48] sm:$0xff]
    %v515 = vld [vmem:[#allocation2 + $0x50] sm:$0xff]
    %v516 = vld [vmem:[#allocation2 + $0x58] sm:$0xff]
    %v517 = vld [vmem:[#allocation2 + $0x60] sm:$0xff]
    %v518 = vld [vmem:[#allocation2 + $0x68] sm:$0xff]
    %v519 = vld [vmem:[#allocation2 + $0x70] sm:$0xff]
    %v520 = vld [vmem:[#allocation2 + $0x78] sm:$0xff]
    %v521 = vld [vmem:[%s5] sm:$0x1]
    %v523 = vlaneseq
    %v524 = vshrl.u32 %v523, 7
    %v525 = vsub.s32 0, %v524
    %v526 = vrot.slane %v521, %v525
    %v528 = vadd.f32 %v505, %v526
    %v529 = vadd.f32 %v506, %v526
    %v530 = vadd.f32 %v507, %v526
    %v531 = vadd.f32 %v508, %v526
    %v532 = vadd.f32 %v509, %v526
    %v533 = vadd.f32 %v510, %v526
    %v534 = vadd.f32 %v511, %v526
    %v535 = vadd.f32 %v512, %v526
    %v536 = vadd.f32 %v513, %v526
    %v537 = vadd.f32 %v514, %v526
    %v538 = vadd.f32 %v515, %v526
    %v539 = vadd.f32 %v516, %v526
    %v540 = vadd.f32 %v517, %v526
    %v541 = vadd.f32 %v518, %v526
    %v542 = vadd.f32 %v519, %v526
    %v543 = vadd.f32 %v520, %v526
    %v544 = vmax.f32 %v528, 0.0
    %v545 = vmax.f32 %v529, 0.0
    %v546 = vmax.f32 %v530, 0.0
    %v547 = vmax.f32 %v531, 0.0
    %v548 = vmax.f32 %v532, 0.0
    %v549 = vmax.f32 %v533, 0.0
    %v550 = vmax.f32 %v534, 0.0
    %v551 = vmax.f32 %v535, 0.0
    %v552 = vmax.f32 %v536, 0.0
    %v553 = vmax.f32 %v537, 0.0
    %v554 = vmax.f32 %v538, 0.0
    %v555 = vmax.f32 %v539, 0.0
    %v556 = vmax.f32 %v540, 0.0
    %v557 = vmax.f32 %v541, 0.0
    %v558 = vmax.f32 %v542, 0.0
    %v559 = vmax.f32 %v543, 0.0
    %v560 = vpack.c.bf16 %v545, %v544
    %v561 = vpack.c.bf16 %v547, %v546
    %v562 = vpack.c.bf16 %v549, %v548
    %v563 = vpack.c.bf16 %v551, %v550
    %v564 = vpack.c.bf16 %v553, %v552
    %v565 = vpack.c.bf16 %v555, %v554
    %v566 = vpack.c.bf16 %v557, %v556
    %v567 = vpack.c.bf16 %v559, %v558
    %v568 = vld [vmem:[%s6] sm:$0xf]
    %v569 = vld [vmem:[%s6 + $0x4] sm:$0xf]
    %v570 = vld [vmem:[%s6 + $0x8] sm:$0xf]
    %v571 = vld [vmem:[%s6 + $0xc] sm:$0xf]
    %v572 = vld [vmem:[%s6 + $0x10] sm:$0xf]
    %v573 = vld [vmem:[%s6 + $0x14] sm:$0xf]
    %v574 = vld [vmem:[%s6 + $0x18] sm:$0xf]
    %v575 = vld [vmem:[%s6 + $0x1c] sm:$0xf]
    %v576 = vld [vmem:[%s6 + $0x20] sm:$0xf]
    %v577 = vld [vmem:[%s6 + $0x24] sm:$0xf]
    %v578 = vld [vmem:[%s6 + $0x28] sm:$0xf]
    %v579 = vld [vmem:[%s6 + $0x2c] sm:$0xf]
    %v580 = vld [vmem:[%s6 + $0x30] sm:$0xf]
    %v581 = vld [vmem:[%s6 + $0x34] sm:$0xf]
    %v582 = vld [vmem:[%s6 + $0x38] sm:$0xf]
    %v583 = vld [vmem:[%s6 + $0x3c] sm:$0xf]
    %v600 = vunpack.c.l.b16 %v568
    %v601 = vunpack.c.l.b16 %v569
    %v602 = vunpack.c.l.b16 %v570
    %v603 = vunpack.c.l.b16 %v571
    %v604 = vunpack.c.l.b16 %v572
    %v605 = vunpack.c.l.b16 %v573
    %v606 = vunpack.c.l.b16 %v574
    %v607 = vunpack.c.l.b16 %v575
    %v608 = vunpack.c.l.b16 %v576
    %v609 = vunpack.c.l.b16 %v577
    %v610 = vunpack.c.l.b16 %v578
    %v611 = vunpack.c.l.b16 %v579
    %v612 = vunpack.c.l.b16 %v580
    %v613 = vunpack.c.l.b16 %v581
    %v614 = vunpack.c.l.b16 %v582
    %v615 = vunpack.c.l.b16 %v583
    %v616 = vpack.c.b16 %v601, %v600
    %v617 = vpack.c.b16 %v603, %v602
    %v618 = vpack.c.b16 %v605, %v604
    %v619 = vpack.c.b16 %v607, %v606
    %v620 = vpack.c.b16 %v609, %v608
    %v621 = vpack.c.b16 %v611, %v610
    %v622 = vpack.c.b16 %v613, %v612
    %v623 = vpack.c.b16 %v615, %v614
    %632 = vmatprep.subr.bf16.mxu0 0
    %633 = vmatpush1.bf16.msra.mxu0 %v623
    %634 = vmatprep.subr.bf16.mxu0 0
    %635 = vmatpush1.bf16.msra.mxu0 %v622
    %636 = vmatprep.subr.bf16.mxu0 0
    %637 = vmatpush1.bf16.msra.mxu0 %v621
    %638 = vmatprep.subr.bf16.mxu0 0
    %639 = vmatpush1.bf16.msra.mxu0 %v620
    %640 = vmatprep.subr.bf16.mxu0 0
    %641 = vmatpush1.bf16.msra.mxu0 %v619
    %642 = vmatprep.subr.bf16.mxu0 0
    %643 = vmatpush1.bf16.msra.mxu0 %v618
    %644 = vmatprep.subr.bf16.mxu0 0
    %645 = vmatpush1.bf16.msra.mxu0 %v617
    %646 = vmatprep.subr.bf16.mxu0 0
    %647 = vmatpush1.bf16.msra.mxu0 %v616
    %648 = vmatprep.subr.bf16.mxu0 0
    %649 = vmatpush2.bf16.msra.mxu0 0
    %650 = vmatprep.subr.bf16.mxu0 0
    %651 = vmatpush2.bf16.msra.mxu0 0
    %652 = vmatprep.subr.bf16.mxu0 0
    %653 = vmatpush2.bf16.msra.mxu0 0
    %654 = vmatprep.subr.bf16.mxu0 0
    %655 = vmatpush2.bf16.msra.mxu0 0
    %656 = vmatprep.subr.bf16.mxu0 0
    %657 = vmatpush2.bf16.msra.mxu0 0
    %658 = vmatprep.subr.bf16.mxu0 0
    %659 = vmatpush2.bf16.msra.mxu0 0
    %660 = vmatprep.subr.bf16.mxu0 0
    %661 = vmatpush2.bf16.msra.mxu0 0
    %662 = vmatprep.subr.bf16.mxu0 0
    %663 = vmatpush2.bf16.msra.mxu0 0
    %664 = vmatprep.mubr.bf16.mxu0 0
    %665 = vmatmul.mubr.bf16.gmra.mxu0 %v560
    %v666 = vpop.f32.mrf.mxu0
    %v667 = vadd.f32 0.0, %v666
    %v668 = vpop.f32.mrf.mxu0
    %v669 = vpop.f32.mrf.mxu0
    %v670 = vadd.f32 0.0, %v669
    %v671 = vpop.f32.mrf.mxu0
    %672 = vmatprep.mubr.bf16.mxu0 0
    %673 = vmatmul.mubr.bf16.gmra.mxu0 %v561
    %v674 = vpop.f32.mrf.mxu0
    %v675 = vadd.f32 0.0, %v674
    %v676 = vpop.f32.mrf.mxu0
    %v677 = vpop.f32.mrf.mxu0
    %v678 = vadd.f32 0.0, %v677
    %v679 = vpop.f32.mrf.mxu0
    %680 = vmatprep.mubr.bf16.mxu0 0
    %681 = vmatmul.mubr.bf16.gmra.mxu0 %v562
    %v682 = vpop.f32.mrf.mxu0
    %v683 = vadd.f32 0.0, %v682
    %v684 = vpop.f32.mrf.mxu0
    %v685 = vpop.f32.mrf.mxu0
    %v686 = vadd.f32 0.0, %v685
    %v687 = vpop.f32.mrf.mxu0
    %688 = vmatprep.mubr.bf16.mxu0 0
    %689 = vmatmul.mubr.bf16.gmra.mxu0 %v563
    %v690 = vpop.f32.mrf.mxu0
    %v691 = vadd.f32 0.0, %v690
    %v692 = vpop.f32.mrf.mxu0
    %v693 = vpop.f32.mrf.mxu0
    %v694 = vadd.f32 0.0, %v693
    %v695 = vpop.f32.mrf.mxu0
    %696 = vmatprep.mubr.bf16.mxu0 0
    %697 = vmatmul.mubr.bf16.gmra.mxu0 %v564
    %v698 = vpop.f32.mrf.mxu0
    %v699 = vadd.f32 0.0, %v698
    %v700 = vpop.f32.mrf.mxu0
    %v701 = vpop.f32.mrf.mxu0
    %v702 = vadd.f32 0.0, %v701
    %v703 = vpop.f32.mrf.mxu0
    %704 = vmatprep.mubr.bf16.mxu0 0
    %705 = vmatmul.mubr.bf16.gmra.mxu0 %v565
    %v706 = vpop.f32.mrf.mxu0
    %v707 = vadd.f32 0.0, %v706
    %v708 = vpop.f32.mrf.mxu0
    %v709 = vpop.f32.mrf.mxu0
    %v710 = vadd.f32 0.0, %v709
    %v711 = vpop.f32.mrf.mxu0
    %712 = vmatprep.mubr.bf16.mxu0 0
    %713 = vmatmul.mubr.bf16.gmra.mxu0 %v566
    %v714 = vpop.f32.mrf.mxu0
    %v715 = vadd.f32 0.0, %v714
    %v716 = vpop.f32.mrf.mxu0
    %v717 = vpop.f32.mrf.mxu0
    %v718 = vadd.f32 0.0, %v717
    %v719 = vpop.f32.mrf.mxu0
    %720 = vmatprep.mubr.bf16.mxu0 0
    %721 = vmatmul.mubr.bf16.gmra.mxu0 %v567
    %v722 = vpop.f32.mrf.mxu0
    %v723 = vadd.f32 0.0, %v722
    %v724 = vpop.f32.mrf.mxu0
    %v725 = vpop.f32.mrf.mxu0
    %v726 = vadd.f32 0.0, %v725
    %v727 = vpop.f32.mrf.mxu0
    %728 = vdwg.mxu0
    %v729 = vpack.c.bf16 %v670, %v667
    %v730 = vpack.c.bf16 %v678, %v675
    %v731 = vpack.c.bf16 %v686, %v683
    %v732 = vpack.c.bf16 %v694, %v691
    %v733 = vpack.c.bf16 %v702, %v699
    %v734 = vpack.c.bf16 %v710, %v707
    %v735 = vpack.c.bf16 %v718, %v715
    %v736 = vpack.c.bf16 %v726, %v723
    %v745 = vunpack.c.l.b16 %v729
    %v746 = vunpack.c.h.b16 %v729
    %v747 = vunpack.c.l.b16 %v730
    %v748 = vunpack.c.h.b16 %v730
    %v749 = vunpack.c.l.b16 %v731
    %v750 = vunpack.c.h.b16 %v731
    %v751 = vunpack.c.l.b16 %v732
    %v752 = vunpack.c.h.b16 %v732
    %v753 = vunpack.c.l.b16 %v733
    %v754 = vunpack.c.h.b16 %v733
    %v755 = vunpack.c.l.b16 %v734
    %v756 = vunpack.c.h.b16 %v734
    %v757 = vunpack.c.l.b16 %v735
    %v758 = vunpack.c.h.b16 %v735
    %v759 = vunpack.c.l.b16 %v736
    %v760 = vunpack.c.h.b16 %v736
    %v761 = vpack.c.b16 %v745, %v745
    %v762 = vpack.c.b16 %v746, %v746
    %v763 = vpack.c.b16 %v747, %v747
    %v764 = vpack.c.b16 %v748, %v748
    %v765 = vpack.c.b16 %v749, %v749
    %v766 = vpack.c.b16 %v750, %v750
    %v767 = vpack.c.b16 %v751, %v751
    %v768 = vpack.c.b16 %v752, %v752
    %v769 = vpack.c.b16 %v753, %v753
    %v770 = vpack.c.b16 %v754, %v754
    %v771 = vpack.c.b16 %v755, %v755
    %v772 = vpack.c.b16 %v756, %v756
    %v773 = vpack.c.b16 %v757, %v757
    %v774 = vpack.c.b16 %v758, %v758
    %v775 = vpack.c.b16 %v759, %v759
    %v776 = vpack.c.b16 %v760, %v760
    %793 = vst [vmem:[%s7] sm:$0xf] %v761
    %794 = vst [vmem:[%s7 + $0x4] sm:$0xf] %v762
    %795 = vst [vmem:[%s7 + $0x8] sm:$0xf] %v763
    %796 = vst [vmem:[%s7 + $0xc] sm:$0xf] %v764
    %797 = vst [vmem:[%s7 + $0x10] sm:$0xf] %v765
    %798 = vst [vmem:[%s7 + $0x14] sm:$0xf] %v766
    %799 = vst [vmem:[%s7 + $0x18] sm:$0xf] %v767
    %800 = vst [vmem:[%s7 + $0x1c] sm:$0xf] %v768
    %801 = vst [vmem:[%s7 + $0x20] sm:$0xf] %v769
    %802 = vst [vmem:[%s7 + $0x24] sm:$0xf] %v770
    %803 = vst [vmem:[%s7 + $0x28] sm:$0xf] %v771
    %804 = vst [vmem:[%s7 + $0x2c] sm:$0xf] %v772
    %805 = vst [vmem:[%s7 + $0x30] sm:$0xf] %v773
    %806 = vst [vmem:[%s7 + $0x34] sm:$0xf] %v774
    %807 = vst [vmem:[%s7 + $0x38] sm:$0xf] %v775
    %808 = vst [vmem:[%s7 + $0x3c] sm:$0xf] %v776
  $region33: #{gcn_forward.2} parent=0 // pred_fallthru
    _
  // Predicated region
  $region34: #{gcn_forward.2} parent=0 // pred_check
    _
  $region35: #{gcn_forward.2} parent=0 // pred_check_branch
    %810 = sbr.rel (0) target = $region37
  $region36: #{gcn_forward.2} parent=0 // pred_region
    _
  $region37: #{gcn_forward.2} parent=0 // pred_fallthru
    _
  // Predicated region
  $region38: #{gcn_forward.2} parent=0 // pred_check
    _
  $region39: #{gcn_forward.2} parent=0 // pred_check_branch
    %812 = sbr.rel (0) target = $region41
  $region40: #{gcn_forward.2} parent=0 // pred_region
    _
  $region41: #{gcn_forward.2} parent=0 // pred_fallthru
    _

</llo_original>
